<compile_context>
chip_gen: v7x
topology: tpu7x:2x2x1
jax: 0.10.0
libtpu: 0.0.40
codegen_flags: <defaults>
</compile_context>

<pallas_src>
import functools

import jax
import jax.numpy as jnp
from jax.experimental import pallas as pl
from jax.experimental.pallas import tpu as pltpu


def _bert_classifier_kernel(tid_ref,    # [bB, bS] int32  token ids
                            sid_ref,    # [bB, bS] int32  segment (token-type) ids
                            vl_ref,     # [bB, 1]  int32  valid lengths
                            tok_ref,    # [V, H]   bf16   token-embedding table
                            seg_ref,    # [T, H]   bf16   token-type embedding table
                            wp_ref,     # [H, H]   bf16   pooler dense weight
                            bp_ref,     # [1, H]   f32    pooler dense bias
                            wc_ref,     # [H, Cp]  f32    classifier weight (lane-padded)
                            bc_ref,     # [1, Cp]  f32    classifier bias   (lane-padded)
                            out_ref,    # [bB, Cp] f32
                            acc_ref):   # VMEM scratch: [bB, H] f32
    j = pl.program_id(1)                 # seq tile ("arbitrary" reduction, last)
    nj = pl.num_programs(1)
    bB, bS = tid_ref.shape
    V, H = tok_ref.shape
    T = seg_ref.shape[0]

    @pl.when(j == 0)
    def _():
        acc_ref[...] = jnp.zeros_like(acc_ref)

    # gen_attention_mask: mask[b, s] = 1 iff global position s < valid_length[b].
    # valid_length arrives as a [bB, 1] VMEM vector -> one vector load, no
    # per-row SMEM scalar/select loop.
    vl_col = vl_ref[...]                                               # [bB, 1]
    pos = j * bS + jax.lax.broadcasted_iota(jnp.int32, (bB, bS), 1)
    mask = (pos < vl_col).astype(jnp.float32)                          # [bB, bS]

    # Fused token-embedding gather + masked sum as a one-hot MXU contraction:
    #   sum_s mask[b,s] * tok_emb[ids[b,s], :]  ==  counts[b, :] @ tok_emb
    # with counts[b, v] = #{s in tile : ids[b,s] == v and s < valid_length[b]}.
    # counts are exact small integers (<= bS), so the bf16 cast feeding the MXU
    # is lossless for block_s <= 256 (the default).
    ids = tid_ref[...]                                                 # [bB, bS]
    vocab_iota = jax.lax.broadcasted_iota(jnp.int32, (bB, bS, V), 2)
    masked_onehot = jnp.where(ids[:, :, None] == vocab_iota,
                              mask[:, :, None], 0.0)                   # [bB,bS,V]
    counts = jnp.sum(masked_onehot, axis=1)                            # [bB, V]
    tile_sum = jnp.dot(counts.astype(tok_ref.dtype), tok_ref[...],
                       preferred_element_type=jnp.float32)             # [bB, H]

    # Token-type (segment) embedding: the table is tiny (T == 2 for BERT), so
    # count tokens of each type under the mask and add count_t * row_t (VPU).
    sid = sid_ref[...]
    for t in range(T):                                                 # static
        cnt_t = jnp.sum(mask * (sid == t).astype(jnp.float32),
                        axis=1, keepdims=True)                         # [bB, 1]
        tile_sum = tile_sum + cnt_t * seg_ref[t:t + 1, :].astype(jnp.float32)

    acc_ref[...] += tile_sum

    @pl.when(j == nj - 1)
    def _():
        # Masked mean. Exact divide: the epilogue runs once per batch tile so
        # the approx reciprocal saved nothing and cost accuracy.
        denom = jnp.maximum(vl_col.astype(jnp.float32), 1.0)           # [bB, 1]
        pooled = acc_ref[...] / denom                                  # [bB, H]

        # BERT pooler head: tanh(pooled @ W_pool + b_pool). W_pool is stored
        # bf16 (halves its HBM/VMEM) and widened to f32 for this tiny matmul.
        pooler = jnp.tanh(
            jnp.dot(pooled, wp_ref[...].astype(jnp.float32),
                    preferred_element_type=jnp.float32) + bp_ref[...])

        # classifier: nn.Linear(hidden_size, num_classes), lane-padded to Cp.
        out_ref[...] = (
            jnp.dot(pooler, wc_ref[...], preferred_element_type=jnp.float32)
            + bc_ref[...])


def _vmem_limit_bytes():
    # v7x has 64 MiB VMEM per TensorCore, v5e/v6e have 128 MiB. Use ~3/4 of
    # whatever this chip actually has (48 MiB on v7x, 96 MiB on v5e/v6e)
    # instead of a hard-coded 32 MiB cap.
    try:
        cap = pltpu.get_tpu_info().vmem_capacity_bytes
    except Exception:
        cap = 64 * 1024 * 1024
    return int(cap * 3 // 4)


@functools.partial(jax.jit, static_argnames=("block_b", "block_s"))
def bert_classifier_forward(token_ids, valid_length, segment_ids, params,
                            *, block_b=64, block_s=256):
    B, S = token_ids.shape
    V, H = params["tok_emb"].shape
    T = params["seg_emb"].shape[0]
    C = params["w_cls"].shape[1]
    C_pad = ((C + 127) // 128) * 128          # lane-dense classifier output

    # Tile sizes: clamp to the problem; respect Mosaic's (8, 128) tiling rule.
    block_b = min(block_b, B)
    block_s = min(block_s, S)
    assert B % block_b == 0 and S % block_s == 0, "shapes must tile evenly"
    assert block_b == B or block_b % 8 == 0
    assert block_s == S or block_s % 128 == 0

    tid = token_ids.astype(jnp.int32)
    sid = segment_ids.astype(jnp.int32)
    vl2 = valid_length.astype(jnp.int32).reshape(B, 1)

    # Tables / weights in their storage dtypes (bf16 halves HBM + VMEM).
    tok_emb = params["tok_emb"].astype(jnp.bfloat16)
    seg_emb = params["seg_emb"].astype(jnp.bfloat16)
    w_pool = params["w_pool"].astype(jnp.bfloat16)
    b_pool = params["b_pool"].astype(jnp.float32).reshape(1, H)
    # Zero-pad the classifier head to C_pad lanes; slice back after the call.
    w_cls = jnp.zeros((H, C_pad), jnp.float32).at[:, :C].set(
        params["w_cls"].astype(jnp.float32))
    b_cls = jnp.zeros((1, C_pad), jnp.float32).at[:, :C].set(
        params["b_cls"].astype(jnp.float32).reshape(1, C))

    grid = (B // block_b, S // block_s)

    cost = pl.CostEstimate(
        flops=(2 * B * (S // block_s) * V * H      # one-hot gather matmuls
               + 4 * B * S                         # mask / counts elementwise
               + 2 * B * H * H + 2 * B * H * C_pad),
        transcendentals=B * H,
        bytes_accessed=(2 * B * S * 4 + B * 4                    # ids + lengths
                        + (V + T) * H * 2 + H * H * 2            # bf16 tables/pooler
                        + (H * C_pad + H + C_pad) * 4            # f32 weights/biases
                        + B * C_pad * 4))                        # output

    out = pl.pallas_call(
        _bert_classifier_kernel,
        out_shape=jax.ShapeDtypeStruct((B, C_pad), jnp.float32),
        grid_spec=pltpu.PrefetchScalarGridSpec(
            num_scalar_prefetch=0,
            grid=grid,
            in_specs=[
                pl.BlockSpec((block_b, block_s), lambda i, j: (i, j)),  # token ids
                pl.BlockSpec((block_b, block_s), lambda i, j: (i, j)),  # segment ids
                pl.BlockSpec((block_b, 1), lambda i, j: (i, 0)),        # valid_length
                # Constant-index blocks: fetched once, reused across the grid.
                # TODO(synk): single-buffer these via pipeline_mode=pl.Buffered(1)
                # when universally available (saves ~half their VMEM on v7x).
                pl.BlockSpec((V, H), lambda i, j: (0, 0)),              # tok_emb
                pl.BlockSpec((T, H), lambda i, j: (0, 0)),              # seg_emb
                pl.BlockSpec((H, H), lambda i, j: (0, 0)),              # w_pool
                pl.BlockSpec((1, H), lambda i, j: (0, 0)),              # b_pool
                pl.BlockSpec((H, C_pad), lambda i, j: (0, 0)),          # w_cls
                pl.BlockSpec((1, C_pad), lambda i, j: (0, 0)),          # b_cls
            ],
            out_specs=pl.BlockSpec((block_b, C_pad), lambda i, j: (i, 0)),
            scratch_shapes=[pltpu.VMEM((block_b, H), jnp.float32)],
        ),
        compiler_params=pltpu.CompilerParams(
            dimension_semantics=("parallel", "arbitrary"),
            vmem_limit_bytes=_vmem_limit_bytes()),
        cost_estimate=cost,
    )(tid, sid, vl2, tok_emb, seg_emb, w_pool, b_pool, w_cls, b_cls)

    return out[:, :C]


def _reference_forward(token_ids, valid_length, segment_ids, params):
    emb = (params["tok_emb"].astype(jnp.float32)[token_ids]
           + params["seg_emb"].astype(jnp.float32)[segment_ids])
    S = token_ids.shape[1]
    pos = jnp.arange(S)[None, :]
    attn = (pos < valid_length[:, None]).astype(jnp.float32)
    denom = jnp.maximum(valid_length.astype(jnp.float32)[:, None], 1.0)
    pooled = (emb * attn[:, :, None]).sum(1) / denom
    pooler = jnp.tanh(
        jnp.dot(pooled, params["w_pool"].astype(jnp.float32),
                precision=jax.lax.Precision.HIGHEST)
        + params["b_pool"].astype(jnp.float32))
    return (jnp.dot(pooler, params["w_cls"].astype(jnp.float32),
                    precision=jax.lax.Precision.HIGHEST)
            + params["b_cls"].astype(jnp.float32))


if __name__ == "__main__":
    # Small shapes consistent with the module (hidden 768 -> 64, num_classes=7).
    # block_b=8, block_s=128 -> grid (2, 2): exercises both the parallel batch
    # axis (>= 2 tiles, dual-TC on v7x) and the sequence reduction axis.
    B, S, V, H, C, T = 16, 256, 128, 64, 7, 2

    key = jax.random.PRNGKey(0)
    k_tok, k_vl, k_temb, k_semb, k_wp, k_bp, k_wc, k_bc = jax.random.split(key, 8)

    token_ids = jax.random.randint(k_tok, (B, S), 0, V, dtype=jnp.int32)
    # BERT-style token types: first half = sentence A (0), second half = B (1).
    segment_ids = jnp.broadcast_to(
        (jnp.arange(S)[None, :] >= (S // 2)).astype(jnp.int32), (B, S))
    valid_length = jax.random.randint(k_vl, (B,), 1, S + 1, dtype=jnp.int32)

    params = {
        "tok_emb": (0.1 * jax.random.normal(k_temb, (V, H))).astype(jnp.bfloat16),
        "seg_emb": (0.1 * jax.random.normal(k_semb, (T, H))).astype(jnp.bfloat16),
        "w_pool":  (0.1 * jax.random.normal(k_wp, (H, H))).astype(jnp.bfloat16),
        "b_pool":  0.1 * jax.random.normal(k_bp, (1, H), jnp.float32),
        "w_cls":   0.1 * jax.random.normal(k_wc, (H, C), jnp.float32),
        "b_cls":   0.1 * jax.random.normal(k_bc, (1, C), jnp.float32),
    }

    out = bert_classifier_forward(token_ids, valid_length, segment_ids, params,
                                  block_b=8, block_s=128)
    out = jax.block_until_ready(out)

    ref = _reference_forward(token_ids, valid_length, segment_ids, params)
    assert out.shape == (B, C)
    # Tolerance covers bf16 embedding/pooler storage (shared with the reference)
    # and MXU vs HIGHEST-precision XLA matmul accumulation-order differences.
    assert jnp.allclose(out, ref, atol=2e-3, rtol=2e-2), "mismatch vs reference"

    print("KERNEL_OK")
</pallas_src>

<mosaic_0001>
module attributes {stable_mosaic.version = 11 : i64} {
  func.func @_bert_classifier_kernel(%arg0: i32, %arg1: i32, %arg2: memref<8x128xi32, #tpu.memory_space<vmem>>, %arg3: memref<8x128xi32, #tpu.memory_space<vmem>>, %arg4: memref<8x1xi32, #tpu.memory_space<vmem>>, %arg5: memref<128x64xbf16, #tpu.memory_space<vmem>>, %arg6: memref<2x64xbf16, #tpu.memory_space<vmem>>, %arg7: memref<64x64xbf16, #tpu.memory_space<vmem>>, %arg8: memref<1x64xf32, #tpu.memory_space<vmem>>, %arg9: memref<64x128xf32, #tpu.memory_space<vmem>>, %arg10: memref<1x128xf32, #tpu.memory_space<vmem>>, %arg11: memref<8x128xf32, #tpu.memory_space<vmem>>, %arg12: memref<8x64xf32, #tpu.memory_space<vmem>>) attributes {dimension_semantics = [#tpu.dimension_semantics<parallel>, #tpu.dimension_semantics<arbitrary>], iteration_bounds = array<i64: 2, 2>, scalar_prefetch = 0 : i64, scratch_operands = 1 : i64, tpu.core_type = #tpu.core_type<tc>, window_params = [{transform_indices = @transform_0, window_bounds = array<i64: 8, 128>}, {transform_indices = @transform_1, window_bounds = array<i64: 8, 128>}, {transform_indices = @transform_2, window_bounds = array<i64: 8, 1>}, {pipeline_mode = #tpu.pipeline_mode<synchronous>, transform_indices = @transform_3, window_bounds = array<i64: 128, 64>}, {pipeline_mode = #tpu.pipeline_mode<synchronous>, transform_indices = @transform_4, window_bounds = array<i64: 2, 64>}, {pipeline_mode = #tpu.pipeline_mode<synchronous>, transform_indices = @transform_5, window_bounds = array<i64: 64, 64>}, {pipeline_mode = #tpu.pipeline_mode<synchronous>, transform_indices = @transform_6, window_bounds = array<i64: 1, 64>}, {pipeline_mode = #tpu.pipeline_mode<synchronous>, transform_indices = @transform_7, window_bounds = array<i64: 64, 128>}, {pipeline_mode = #tpu.pipeline_mode<synchronous>, transform_indices = @transform_8, window_bounds = array<i64: 1, 128>}, {transform_indices = @transform_9, window_bounds = array<i64: 8, 128>}]} {
    %c0_i32 = arith.constant 0 : i32
    %0 = arith.cmpi eq, %arg1, %c0_i32 : i32
    %1 = arith.extui %0 : i1 to i32
    %c0_i32_0 = arith.constant 0 : i32
    %2 = arith.cmpi ne, %1, %c0_i32_0 : i32
    scf.if %2 {
      %cst_22 = arith.constant 0.000000e+00 : f32
      %59 = vector.broadcast %cst_22 : f32 to vector<8x64xf32>
      %c0_23 = arith.constant 0 : index
      %c0_24 = arith.constant 0 : index
      %60 = vector.load %arg12[%c0_23, %c0_24] : memref<8x64xf32, #tpu.memory_space<vmem>>, vector<8x64xf32>
      tpu.vector_store %arg12[%c0_23, %c0_24], %59 {strides = array<i32>} : memref<8x64xf32, #tpu.memory_space<vmem>>, vector<8x64xf32>,
    } else {
    }
    %c0 = arith.constant 0 : index
    %c0_1 = arith.constant 0 : index
    %3 = vector.load %arg4[%c0, %c0_1] : memref<8x1xi32, #tpu.memory_space<vmem>>, vector<8x1xi32>
    %c128_i32 = arith.constant 128 : i32
    %4 = arith.muli %arg1, %c128_i32 : i32
    %5 = tpu.iota {dimensions = array<i32: 1>} : vector<8x128xi32>
    %6 = vector.broadcast %4 : i32 to vector<8x128xi32>
    %7 = arith.addi %6, %5 : vector<8x128xi32>
    %8 = vector.broadcast %3 : vector<8x1xi32> to vector<8x128xi32>
    %9 = arith.cmpi slt, %7, %8 : vector<8x128xi32>
    %10 = arith.extui %9 : vector<8x128xi1> to vector<8x128xi32>
    %11 = arith.sitofp %10 : vector<8x128xi32> to vector<8x128xf32>
    %c0_2 = arith.constant 0 : index
    %c0_3 = arith.constant 0 : index
    %12 = vector.load %arg2[%c0_2, %c0_3] : memref<8x128xi32, #tpu.memory_space<vmem>>, vector<8x128xi32>
    %13 = tpu.iota {dimensions = array<i32: 2>} : vector<8x128x128xi32>
    %14 = vector.shape_cast %12 : vector<8x128xi32> to vector<8x128x1xi32>
    %15 = vector.broadcast %14 : vector<8x128x1xi32> to vector<8x128x128xi32>
    %16 = arith.cmpi eq, %15, %13 : vector<8x128x128xi32>
    %17 = vector.shape_cast %11 : vector<8x128xf32> to vector<8x128x1xf32>
    %cst = arith.constant 0.000000e+00 : f32
    %18 = vector.shape_cast %17 : vector<8x128x1xf32> to vector<8x128x1xf32>
    %19 = vector.broadcast %18 : vector<8x128x1xf32> to vector<8x128x128xf32>
    %20 = vector.broadcast %cst : f32 to vector<8x128x128xf32>
    %21 = arith.select %16, %19, %20 : vector<8x128x128xi1>, vector<8x128x128xf32>
    %cst_4 = arith.constant dense<0.000000e+00> : vector<8x128xf32>
    %22 = vector.multi_reduction <add>, %21, %cst_4 [1] : vector<8x128x128xf32> to vector<8x128xf32>
    %23 = arith.truncf %22 : vector<8x128xf32> to vector<8x128xbf16>
    %c0_5 = arith.constant 0 : index
    %c0_6 = arith.constant 0 : index
    %24 = vector.load %arg5[%c0_5, %c0_6] : memref<128x64xbf16, #tpu.memory_space<vmem>>, vector<128x64xbf16>
    %cst_7 = arith.constant dense<0.000000e+00> : vector<8x64xf32>
    %25 = tpu.matmul %23, %24, %cst_7 {dimension_numbers = #tpu.dot_dimension_numbers<[1], [0], [0], [1], [0, 0, 1, 1], [], []>} : vector<8x128xbf16>, vector<128x64xbf16>, vector<8x64xf32> -> vector<8x64xf32>
    %c0_8 = arith.constant 0 : index
    %c0_9 = arith.constant 0 : index
    %26 = vector.load %arg3[%c0_8, %c0_9] : memref<8x128xi32, #tpu.memory_space<vmem>>, vector<8x128xi32>
    %c0_i32_10 = arith.constant 0 : i32
    %27 = vector.broadcast %c0_i32_10 : i32 to vector<8x128xi32>
    %28 = arith.cmpi eq, %26, %27 : vector<8x128xi32>
    %29 = arith.extui %28 : vector<8x128xi1> to vector<8x128xi32>
    %30 = arith.sitofp %29 : vector<8x128xi32> to vector<8x128xf32>
    %31 = arith.mulf %11, %30 : vector<8x128xf32>
    %cst_11 = arith.constant dense<0.000000e+00> : vector<8xf32>
    %32 = vector.multi_reduction <add>, %31, %cst_11 [1] : vector<8x128xf32> to vector<8xf32>
    %33 = vector.shape_cast %32 : vector<8xf32> to vector<8x1xf32>
    %c0_12 = arith.constant 0 : index
    %c0_13 = arith.constant 0 : index
    %34 = vector.load %arg6[%c0_12, %c0_13] : memref<2x64xbf16, #tpu.memory_space<vmem>>, vector<1x64xbf16>
    %35 = arith.extf %34 : vector<1x64xbf16> to vector<1x64xf32>
    %36 = vector.broadcast %33 : vector<8x1xf32> to vector<8x64xf32>
    %37 = vector.broadcast %35 : vector<1x64xf32> to vector<8x64xf32>
    %38 = arith.mulf %36, %37 : vector<8x64xf32>
    %39 = arith.addf %25, %38 : vector<8x64xf32>
    %c1_i32 = arith.constant 1 : i32
    %40 = vector.broadcast %c1_i32 : i32 to vector<8x128xi32>
    %41 = arith.cmpi eq, %26, %40 : vector<8x128xi32>
    %42 = arith.extui %41 : vector<8x128xi1> to vector<8x128xi32>
    %43 = arith.sitofp %42 : vector<8x128xi32> to vector<8x128xf32>
    %44 = arith.mulf %11, %43 : vector<8x128xf32>
    %cst_14 = arith.constant dense<0.000000e+00> : vector<8xf32>
    %45 = vector.multi_reduction <add>, %44, %cst_14 [1] : vector<8x128xf32> to vector<8xf32>
    %46 = vector.shape_cast %45 : vector<8xf32> to vector<8x1xf32>
    %c1 = arith.constant 1 : index
    %c0_15 = arith.constant 0 : index
    %47 = vector.load %arg6[%c1, %c0_15] : memref<2x64xbf16, #tpu.memory_space<vmem>>, vector<1x64xbf16>
    %48 = arith.extf %47 : vector<1x64xbf16> to vector<1x64xf32>
    %49 = vector.broadcast %46 : vector<8x1xf32> to vector<8x64xf32>
    %50 = vector.broadcast %48 : vector<1x64xf32> to vector<8x64xf32>
    %51 = arith.mulf %49, %50 : vector<8x64xf32>
    %52 = arith.addf %39, %51 : vector<8x64xf32>
    %c0_16 = arith.constant 0 : index
    %c0_17 = arith.constant 0 : index
    %53 = vector.load %arg12[%c0_16, %c0_17] : memref<8x64xf32, #tpu.memory_space<vmem>>, vector<8x64xf32>
    %54 = arith.addf %53, %52 : vector<8x64xf32>
    %c0_18 = arith.constant 0 : index
    %c0_19 = arith.constant 0 : index
    %55 = vector.load %arg12[%c0_18, %c0_19] : memref<8x64xf32, #tpu.memory_space<vmem>>, vector<8x64xf32>
    tpu.vector_store %arg12[%c0_18, %c0_19], %54 {strides = array<i32>} : memref<8x64xf32, #tpu.memory_space<vmem>>, vector<8x64xf32>,
    %c1_i32_20 = arith.constant 1 : i32
    %56 = arith.cmpi eq, %arg1, %c1_i32_20 : i32
    %57 = arith.extui %56 : i1 to i32
    %c0_i32_21 = arith.constant 0 : i32
    %58 = arith.cmpi ne, %57, %c0_i32_21 : i32
    scf.if %58 {
      %59 = arith.sitofp %3 : vector<8x1xi32> to vector<8x1xf32>
      %cst_22 = arith.constant 1.000000e+00 : f32
      %60 = vector.broadcast %cst_22 : f32 to vector<8x1xf32>
      %61 = arith.maximumf %59, %60 : vector<8x1xf32>
      %c0_23 = arith.constant 0 : index
      %c0_24 = arith.constant 0 : index
      %62 = vector.load %arg12[%c0_23, %c0_24] : memref<8x64xf32, #tpu.memory_space<vmem>>, vector<8x64xf32>
      %63 = vector.broadcast %61 : vector<8x1xf32> to vector<8x64xf32>
      %64 = arith.divf %62, %63 : vector<8x64xf32>
      %c0_25 = arith.constant 0 : index
      %c0_26 = arith.constant 0 : index
      %65 = vector.load %arg7[%c0_25, %c0_26] : memref<64x64xbf16, #tpu.memory_space<vmem>>, vector<64x64xbf16>
      %66 = arith.extf %65 : vector<64x64xbf16> to vector<64x64xf32>
      %cst_27 = arith.constant dense<0.000000e+00> : vector<8x64xf32>
      %67 = tpu.matmul %64, %66, %cst_27 {dimension_numbers = #tpu.dot_dimension_numbers<[1], [0], [0], [1], [0, 0, 1, 1], [], []>} : vector<8x64xf32>, vector<64x64xf32>, vector<8x64xf32> -> vector<8x64xf32>
      %c0_28 = arith.constant 0 : index
      %c0_29 = arith.constant 0 : index
      %68 = vector.load %arg8[%c0_28, %c0_29] : memref<1x64xf32, #tpu.memory_space<vmem>>, vector<1x64xf32>
      %69 = vector.broadcast %68 : vector<1x64xf32> to vector<8x64xf32>
      %70 = arith.addf %67, %69 : vector<8x64xf32>
      %71 = math.tanh %70 : vector<8x64xf32>
      %c0_30 = arith.constant 0 : index
      %c0_31 = arith.constant 0 : index
      %72 = vector.load %arg9[%c0_30, %c0_31] : memref<64x128xf32, #tpu.memory_space<vmem>>, vector<64x128xf32>
      %cst_32 = arith.constant dense<0.000000e+00> : vector<8x128xf32>
      %73 = tpu.matmul %71, %72, %cst_32 {dimension_numbers = #tpu.dot_dimension_numbers<[1], [0], [0], [1], [0, 0, 1, 1], [], []>} : vector<8x64xf32>, vector<64x128xf32>, vector<8x128xf32> -> vector<8x128xf32>
      %c0_33 = arith.constant 0 : index
      %c0_34 = arith.constant 0 : index
      %74 = vector.load %arg10[%c0_33, %c0_34] : memref<1x128xf32, #tpu.memory_space<vmem>>, vector<1x128xf32>
      %75 = vector.broadcast %74 : vector<1x128xf32> to vector<8x128xf32>
      %76 = arith.addf %73, %75 : vector<8x128xf32>
      %c0_35 = arith.constant 0 : index
      %c0_36 = arith.constant 0 : index
      %77 = vector.load %arg11[%c0_35, %c0_36] : memref<8x128xf32, #tpu.memory_space<vmem>>, vector<8x128xf32>
      tpu.vector_store %arg11[%c0_35, %c0_36], %76 {strides = array<i32>} : memref<8x128xf32, #tpu.memory_space<vmem>>, vector<8x128xf32>,
    } else {
    }
    return
  }
  func.func @transform_0(%arg0: i32, %arg1: i32) -> (i32, i32) {
    %c0_i32 = arith.constant 0 : i32
    return %arg0, %arg1 : i32, i32
  }
  func.func @transform_1(%arg0: i32, %arg1: i32) -> (i32, i32) {
    %c0_i32 = arith.constant 0 : i32
    return %arg0, %arg1 : i32, i32
  }
  func.func @transform_2(%arg0: i32, %arg1: i32) -> (i32, i32) {
    %c0_i32 = arith.constant 0 : i32
    %c0_i32_0 = arith.constant 0 : i32
    return %arg0, %c0_i32 : i32, i32
  }
  func.func @transform_3(%arg0: i32, %arg1: i32) -> (i32, i32) {
    %c0_i32 = arith.constant 0 : i32
    %c0_i32_0 = arith.constant 0 : i32
    %c0_i32_1 = arith.constant 0 : i32
    return %c0_i32, %c0_i32_0 : i32, i32
  }
  func.func @transform_4(%arg0: i32, %arg1: i32) -> (i32, i32) {
    %c0_i32 = arith.constant 0 : i32
    %c0_i32_0 = arith.constant 0 : i32
    %c0_i32_1 = arith.constant 0 : i32
    return %c0_i32, %c0_i32_0 : i32, i32
  }
  func.func @transform_5(%arg0: i32, %arg1: i32) -> (i32, i32) {
    %c0_i32 = arith.constant 0 : i32
    %c0_i32_0 = arith.constant 0 : i32
    %c0_i32_1 = arith.constant 0 : i32
    return %c0_i32, %c0_i32_0 : i32, i32
  }
  func.func @transform_6(%arg0: i32, %arg1: i32) -> (i32, i32) {
    %c0_i32 = arith.constant 0 : i32
    %c0_i32_0 = arith.constant 0 : i32
    %c0_i32_1 = arith.constant 0 : i32
    return %c0_i32, %c0_i32_0 : i32, i32
  }
  func.func @transform_7(%arg0: i32, %arg1: i32) -> (i32, i32) {
    %c0_i32 = arith.constant 0 : i32
    %c0_i32_0 = arith.constant 0 : i32
    %c0_i32_1 = arith.constant 0 : i32
    return %c0_i32, %c0_i32_0 : i32, i32
  }
  func.func @transform_8(%arg0: i32, %arg1: i32) -> (i32, i32) {
    %c0_i32 = arith.constant 0 : i32
    %c0_i32_0 = arith.constant 0 : i32
    %c0_i32_1 = arith.constant 0 : i32
    return %c0_i32, %c0_i32_0 : i32, i32
  }
  func.func @transform_9(%arg0: i32, %arg1: i32) -> (i32, i32) {
    %c0_i32 = arith.constant 0 : i32
    %c0_i32_0 = arith.constant 0 : i32
    return %arg0, %c0_i32 : i32, i32
  }
}

</mosaic_0001>

<llo_original>
// kernel: bert_classifier_forward.1
$region0: #{bert_classifier_forward.1}
  #allocation0 [shape = 'u32[]', space=smem, size = 0x4, offset = 0x4, fixed_abs, tag = 'smem constant byte address 0x4 - core index']
  #allocation1 [shape = 'u32[144,128]{1,0:T(1,128)}', space=vmem, size = 0x12000, scoped, tag = 'internal scratch']
  #allocation2 [shape = 'f32[8,64]{1,0:T(8,128)}', space=vmem, size = 0x1000, scoped, tag = 'scratch operand']
  %s0 = inlined_call_operand.vmem [shape: s32[16,256], index: 0, kind: input, shape index: {}]
  %s1 = inlined_call_operand.vmem [shape: s32[16,256], index: 1, kind: input, shape index: {}]
  %s2 = inlined_call_operand.vmem [shape: s32[16,1], index: 2, kind: input, shape index: {}]
  %s3 = inlined_call_operand.vmem [shape: bf16[128,64], index: 3, kind: input, shape index: {}]
  %s4 = inlined_call_operand.vmem [shape: bf16[2,64], index: 4, kind: input, shape index: {}]
  %s5 = inlined_call_operand.vmem [shape: bf16[64,64], index: 5, kind: input, shape index: {}]
  %s6 = inlined_call_operand.vmem [shape: f32[1,64], index: 6, kind: input, shape index: {}]
  %s7 = inlined_call_operand.vmem [shape: f32[64,128], index: 7, kind: input, shape index: {}]
  %s8 = inlined_call_operand.vmem [shape: f32[1,128], index: 8, kind: input, shape index: {}]
  %s9 = inlined_call_operand.vmem [shape: f32[16,128], index: 9, kind: output, shape index: {}]
  %s10 = sld [smem:[#allocation0]]
  $region77: #{bert_classifier_forward.1} parent=0
    _
  %s12 = ssub.s32 1, %s10
  %s13 = scalar_select 0, %s12, %s10
  loop: start=0, step=1, limit=6
  $region2: #{bert_classifier_forward.1} parent=0 // loop_pre_header
    _
  $region3: #{bert_classifier_forward.1} parent=0 // loop_header
    %s15 = sphi 0, %s19
    %p16 = scmp.ge.s32.totalorder %s15, 6
    %s22 = sphi 0, %s34
    %s23 = sphi 0, %s30
    %s24 = sphi 0, %s22
    %s25 = sphi 0, %s23
    %s26 = sphi 0, %s24
    %s27 = sphi 0, %s25
    %s39 = sphi 0, %s41
    %s42 = sphi 0, %s39
    %s43 = sphi 0, %s42
    %s59 = sphi 0, %s43
    %s67 = sphi 0, %s69
    %s70 = sphi 0, %s67
    %s71 = sphi 0, %s70
    %s87 = sphi 0, %s71
    %s93 = sphi 0, %s95
    %s96 = sphi 0, %s93
    %s97 = sphi 0, %s96
    %s113 = sphi 0, %s97
    %s117 = sphi 0, %s117
    %s119 = sphi 0, %s117
    %s120 = sphi 0, %s119
    %s134 = sphi 0, %s120
    %s138 = sphi 0, %s138
    %s140 = sphi 0, %s138
    %s141 = sphi 0, %s140
    %s155 = sphi 0, %s141
    %s159 = sphi 0, %s159
    %s161 = sphi 0, %s159
    %s162 = sphi 0, %s161
    %s176 = sphi 0, %s162
    %s180 = sphi 0, %s180
    %s182 = sphi 0, %s180
    %s183 = sphi 0, %s182
    %s197 = sphi 0, %s183
    %s201 = sphi 0, %s201
    %s203 = sphi 0, %s201
    %s204 = sphi 0, %s203
    %s218 = sphi 0, %s204
    %s222 = sphi 0, %s222
    %s224 = sphi 0, %s222
    %s225 = sphi 0, %s224
    %s239 = sphi 0, %s225
    %s245 = sphi 0, %s247
    %s248 = sphi 0, %s245
    %s249 = sphi 0, %s248
    %s265 = sphi 0, %s249
  $region4: #{bert_classifier_forward.1} parent=0 // loop_header_branch
    %18 = sbr.rel (%p16) target = $region8
  $region5: #{bert_classifier_forward.1} parent=0 // loop_body
    %s20 = ssub.s32 %s15, 1
    %s21 = ssub.s32 %s15, 2
    %s28 = sadd.s32 1, %s23
    %p29 = scmp.ge.s32.totalorder %s28, 2
    %s30 = scalar_select %p29, 0, %s28
    %s31 = sadd.s32 1, %s22
    %s32 = scalar_select %p29, %s31, %s22
    %p33 = scmp.ge.s32.totalorder %s32, 2
    %s34 = scalar_select %p33, 0, %s32
    %s35 = ssub.s32 %s22, %s34
    %s36 = ssub.s32 %s23, %s30
    %s37 = sor.u32 %s35, %s36
    %p38 = scmp.eq.s32.totalorder %s37, 0
    %s40 = sadd.s32 %s39, 1
    %s41 = scalar_select %p38, %s39, %s40
    %p44 = pneg %p38
    %p45 = scmp.eq.s32.totalorder %s15, 3
    %p46 = por %p44, %p45
    %p47 = scmp.ne.s32.totalorder %s39, %s42
    %p48 = scmp.eq.s32.totalorder %s15, 0
    %p49 = por %p47, %p48
    %p50 = scmp.ne.s32.totalorder %s39, %s42
    %p51 = scmp.eq.s32.totalorder %s20, 3
    %p52 = por %p50, %p51
    %p53 = scmp.ne.s32.totalorder %s42, %s43
    %p54 = scmp.eq.s32.totalorder %s20, 0
    %p55 = por %p53, %p54
    %p56 = scmp.ne.s32.totalorder %s42, %s43
    %p57 = scmp.eq.s32.totalorder %s21, 3
    %p58 = por %p56, %p57
    %p60 = scmp.ne.s32.totalorder %s43, %s59
    %p61 = scmp.eq.s32.totalorder %s21, 0
    %p62 = por %p60, %p61
    %s63 = ssub.s32 %s22, %s34
    %s64 = ssub.s32 %s23, %s30
    %s65 = sor.u32 %s63, %s64
    %p66 = scmp.eq.s32.totalorder %s65, 0
    %s68 = sadd.s32 %s67, 1
    %s69 = scalar_select %p66, %s67, %s68
    %p72 = pneg %p66
    %p73 = scmp.eq.s32.totalorder %s15, 3
    %p74 = por %p72, %p73
    %p75 = scmp.ne.s32.totalorder %s67, %s70
    %p76 = scmp.eq.s32.totalorder %s15, 0
    %p77 = por %p75, %p76
    %p78 = scmp.ne.s32.totalorder %s67, %s70
    %p79 = scmp.eq.s32.totalorder %s20, 3
    %p80 = por %p78, %p79
    %p81 = scmp.ne.s32.totalorder %s70, %s71
    %p82 = scmp.eq.s32.totalorder %s20, 0
    %p83 = por %p81, %p82
    %p84 = scmp.ne.s32.totalorder %s70, %s71
    %p85 = scmp.eq.s32.totalorder %s21, 3
    %p86 = por %p84, %p85
    %p88 = scmp.ne.s32.totalorder %s71, %s87
    %p89 = scmp.eq.s32.totalorder %s21, 0
    %p90 = por %p88, %p89
    %s91 = ssub.s32 %s22, %s34
    %p92 = scmp.eq.s32.totalorder %s91, 0
    %s94 = sadd.s32 %s93, 1
    %s95 = scalar_select %p92, %s93, %s94
    %p98 = pneg %p92
    %p99 = scmp.eq.s32.totalorder %s15, 3
    %p100 = por %p98, %p99
    %p101 = scmp.ne.s32.totalorder %s93, %s96
    %p102 = scmp.eq.s32.totalorder %s15, 0
    %p103 = por %p101, %p102
    %p104 = scmp.ne.s32.totalorder %s93, %s96
    %p105 = scmp.eq.s32.totalorder %s20, 3
    %p106 = por %p104, %p105
    %p107 = scmp.ne.s32.totalorder %s96, %s97
    %p108 = scmp.eq.s32.totalorder %s20, 0
    %p109 = por %p107, %p108
    %p110 = scmp.ne.s32.totalorder %s96, %s97
    %p111 = scmp.eq.s32.totalorder %s21, 3
    %p112 = por %p110, %p111
    %p114 = scmp.ne.s32.totalorder %s97, %s113
    %p115 = scmp.eq.s32.totalorder %s21, 0
    %p116 = por %p114, %p115
    %s118 = sadd.s32 %s117, 1
    %p121 = scmp.eq.s32.totalorder %s15, 3
    %p122 = scmp.ne.s32.totalorder %s117, %s119
    %p123 = scmp.eq.s32.totalorder %s15, 0
    %p124 = por %p122, %p123
    %p125 = scmp.ne.s32.totalorder %s117, %s119
    %p126 = scmp.eq.s32.totalorder %s20, 3
    %p127 = por %p125, %p126
    %p128 = scmp.ne.s32.totalorder %s119, %s120
    %p129 = scmp.eq.s32.totalorder %s20, 0
    %p130 = por %p128, %p129
    %p131 = scmp.ne.s32.totalorder %s119, %s120
    %p132 = scmp.eq.s32.totalorder %s21, 3
    %p133 = por %p131, %p132
    %p135 = scmp.ne.s32.totalorder %s120, %s134
    %p136 = scmp.eq.s32.totalorder %s21, 0
    %p137 = por %p135, %p136
    %s139 = sadd.s32 %s138, 1
    %p142 = scmp.eq.s32.totalorder %s15, 3
    %p143 = scmp.ne.s32.totalorder %s138, %s140
    %p144 = scmp.eq.s32.totalorder %s15, 0
    %p145 = por %p143, %p144
    %p146 = scmp.ne.s32.totalorder %s138, %s140
    %p147 = scmp.eq.s32.totalorder %s20, 3
    %p148 = por %p146, %p147
    %p149 = scmp.ne.s32.totalorder %s140, %s141
    %p150 = scmp.eq.s32.totalorder %s20, 0
    %p151 = por %p149, %p150
    %p152 = scmp.ne.s32.totalorder %s140, %s141
    %p153 = scmp.eq.s32.totalorder %s21, 3
    %p154 = por %p152, %p153
    %p156 = scmp.ne.s32.totalorder %s141, %s155
    %p157 = scmp.eq.s32.totalorder %s21, 0
    %p158 = por %p156, %p157
    %s160 = sadd.s32 %s159, 1
    %p163 = scmp.eq.s32.totalorder %s15, 3
    %p164 = scmp.ne.s32.totalorder %s159, %s161
    %p165 = scmp.eq.s32.totalorder %s15, 0
    %p166 = por %p164, %p165
    %p167 = scmp.ne.s32.totalorder %s159, %s161
    %p168 = scmp.eq.s32.totalorder %s20, 3
    %p169 = por %p167, %p168
    %p170 = scmp.ne.s32.totalorder %s161, %s162
    %p171 = scmp.eq.s32.totalorder %s20, 0
    %p172 = por %p170, %p171
    %p173 = scmp.ne.s32.totalorder %s161, %s162
    %p174 = scmp.eq.s32.totalorder %s21, 3
    %p175 = por %p173, %p174
    %p177 = scmp.ne.s32.totalorder %s162, %s176
    %p178 = scmp.eq.s32.totalorder %s21, 0
    %p179 = por %p177, %p178
    %s181 = sadd.s32 %s180, 1
    %p184 = scmp.eq.s32.totalorder %s15, 3
    %p185 = scmp.ne.s32.totalorder %s180, %s182
    %p186 = scmp.eq.s32.totalorder %s15, 0
    %p187 = por %p185, %p186
    %p188 = scmp.ne.s32.totalorder %s180, %s182
    %p189 = scmp.eq.s32.totalorder %s20, 3
    %p190 = por %p188, %p189
    %p191 = scmp.ne.s32.totalorder %s182, %s183
    %p192 = scmp.eq.s32.totalorder %s20, 0
    %p193 = por %p191, %p192
    %p194 = scmp.ne.s32.totalorder %s182, %s183
    %p195 = scmp.eq.s32.totalorder %s21, 3
    %p196 = por %p194, %p195
    %p198 = scmp.ne.s32.totalorder %s183, %s197
    %p199 = scmp.eq.s32.totalorder %s21, 0
    %p200 = por %p198, %p199
    %s202 = sadd.s32 %s201, 1
    %p205 = scmp.eq.s32.totalorder %s15, 3
    %p206 = scmp.ne.s32.totalorder %s201, %s203
    %p207 = scmp.eq.s32.totalorder %s15, 0
    %p208 = por %p206, %p207
    %p209 = scmp.ne.s32.totalorder %s201, %s203
    %p210 = scmp.eq.s32.totalorder %s20, 3
    %p211 = por %p209, %p210
    %p212 = scmp.ne.s32.totalorder %s203, %s204
    %p213 = scmp.eq.s32.totalorder %s20, 0
    %p214 = por %p212, %p213
    %p215 = scmp.ne.s32.totalorder %s203, %s204
    %p216 = scmp.eq.s32.totalorder %s21, 3
    %p217 = por %p215, %p216
    %p219 = scmp.ne.s32.totalorder %s204, %s218
    %p220 = scmp.eq.s32.totalorder %s21, 0
    %p221 = por %p219, %p220
    %s223 = sadd.s32 %s222, 1
    %p226 = scmp.eq.s32.totalorder %s15, 3
    %p227 = scmp.ne.s32.totalorder %s222, %s224
    %p228 = scmp.eq.s32.totalorder %s15, 0
    %p229 = por %p227, %p228
    %p230 = scmp.ne.s32.totalorder %s222, %s224
    %p231 = scmp.eq.s32.totalorder %s20, 3
    %p232 = por %p230, %p231
    %p233 = scmp.ne.s32.totalorder %s224, %s225
    %p234 = scmp.eq.s32.totalorder %s20, 0
    %p235 = por %p233, %p234
    %p236 = scmp.ne.s32.totalorder %s224, %s225
    %p237 = scmp.eq.s32.totalorder %s21, 3
    %p238 = por %p236, %p237
    %p240 = scmp.ne.s32.totalorder %s225, %s239
    %p241 = scmp.eq.s32.totalorder %s21, 0
    %p242 = por %p240, %p241
    %s243 = ssub.s32 %s22, %s34
    %p244 = scmp.eq.s32.totalorder %s243, 0
    %s246 = sadd.s32 %s245, 1
    %s247 = scalar_select %p244, %s245, %s246
    %p250 = pneg %p244
    %p251 = scmp.eq.s32.totalorder %s15, 3
    %p252 = por %p250, %p251
    %p253 = scmp.ne.s32.totalorder %s245, %s248
    %p254 = scmp.eq.s32.totalorder %s15, 0
    %p255 = por %p253, %p254
    %p256 = scmp.ne.s32.totalorder %s245, %s248
    %p257 = scmp.eq.s32.totalorder %s20, 3
    %p258 = por %p256, %p257
    %p259 = scmp.ne.s32.totalorder %s248, %s249
    %p260 = scmp.eq.s32.totalorder %s20, 0
    %p261 = por %p259, %p260
    %p262 = scmp.ne.s32.totalorder %s248, %s249
    %p263 = scmp.eq.s32.totalorder %s21, 3
    %p264 = por %p262, %p263
    %p266 = scmp.ne.s32.totalorder %s249, %s265
    %p267 = scmp.eq.s32.totalorder %s21, 0
    %p268 = por %p266, %p267
    %p269 = scmp.le.s32.totalorder 1, %s15
    %p270 = scmp.lt.s32.totalorder %s15, 5
    %p271 = pnand %p269, %p270
    %p272 = pneg %p271
    // Predicated region
    $region9: #{bert_classifier_forward.1} parent=5 // pred_check
      _
    $region10: #{bert_classifier_forward.1} parent=5 // pred_check_branch
      %274 = sbr.rel (%p271) target = $region12
    $region11: #{bert_classifier_forward.1} parent=5 // pred_region
      %s275 = ssub.s32 %s15, 1
      // Predicated region
      $region13: #{bert_classifier_forward.1} parent=11 // pred_check
        %p276 = pneg %p130
      $region14: #{bert_classifier_forward.1} parent=11 // pred_check_branch
        %278 = sbr.rel (%p276) target = $region16
      $region15: #{bert_classifier_forward.1} parent=11 // pred_region
        _
      $region16: #{bert_classifier_forward.1} parent=11 // pred_fallthru
        _
      // Predicated region
      $region17: #{bert_classifier_forward.1} parent=11 // pred_check
        %p279 = pneg %p151
      $region18: #{bert_classifier_forward.1} parent=11 // pred_check_branch
        %281 = sbr.rel (%p279) target = $region20
      $region19: #{bert_classifier_forward.1} parent=11 // pred_region
        _
      $region20: #{bert_classifier_forward.1} parent=11 // pred_fallthru
        _
      // Predicated region
      $region21: #{bert_classifier_forward.1} parent=11 // pred_check
        %p282 = pneg %p172
      $region22: #{bert_classifier_forward.1} parent=11 // pred_check_branch
        %284 = sbr.rel (%p282) target = $region24
      $region23: #{bert_classifier_forward.1} parent=11 // pred_region
        _
      $region24: #{bert_classifier_forward.1} parent=11 // pred_fallthru
        _
      // Predicated region
      $region25: #{bert_classifier_forward.1} parent=11 // pred_check
        %p285 = pneg %p193
      $region26: #{bert_classifier_forward.1} parent=11 // pred_check_branch
        %287 = sbr.rel (%p285) target = $region28
      $region27: #{bert_classifier_forward.1} parent=11 // pred_region
        _
      $region28: #{bert_classifier_forward.1} parent=11 // pred_fallthru
        _
      // Predicated region
      $region29: #{bert_classifier_forward.1} parent=11 // pred_check
        %p288 = pneg %p214
      $region30: #{bert_classifier_forward.1} parent=11 // pred_check_branch
        %290 = sbr.rel (%p288) target = $region32
      $region31: #{bert_classifier_forward.1} parent=11 // pred_region
        _
      $region32: #{bert_classifier_forward.1} parent=11 // pred_fallthru
        _
      // Predicated region
      $region33: #{bert_classifier_forward.1} parent=11 // pred_check
        %p291 = pneg %p235
      $region34: #{bert_classifier_forward.1} parent=11 // pred_check_branch
        %293 = sbr.rel (%p291) target = $region36
      $region35: #{bert_classifier_forward.1} parent=11 // pred_region
        _
      $region36: #{bert_classifier_forward.1} parent=11 // pred_fallthru
        _
    $region12: #{bert_classifier_forward.1} parent=5 // pred_fallthru
      _
    %p294 = scmp.lt.s32.totalorder %s15, 4
    // Predicated region
    $region37: #{bert_classifier_forward.1} parent=5 // pred_check
      %p295 = pneg %p294
    $region38: #{bert_classifier_forward.1} parent=5 // pred_check_branch
      %297 = sbr.rel (%p295) target = $region40
    $region39: #{bert_classifier_forward.1} parent=5 // pred_region
      // Predicated region
      $region41: #{bert_classifier_forward.1} parent=39 // pred_check
        %p298 = pneg %p49
      $region42: #{bert_classifier_forward.1} parent=39 // pred_check_branch
        %300 = sbr.rel (%p298) target = $region44
      $region43: #{bert_classifier_forward.1} parent=39 // pred_region
        %p301 = scmp.lt.s32.totalorder %s22, 1
        %s302 = scalar_select %p301, %s22, 1
        %p303 = scmp.lt.s32.totalorder %s23, 1
        %s304 = scalar_select %p303, %s23, 1
        %s305 = smul.addr %s302, 2
        %s306 = sadd.s32 %s304, %s305
        %s307 = smul.addr %s306, 8
        %s308 = scalar_lea.vmem %s0, %s307
      $region44: #{bert_classifier_forward.1} parent=39 // pred_fallthru
        _
      // Predicated region
      $region45: #{bert_classifier_forward.1} parent=39 // pred_check
        %p309 = pneg %p77
      $region46: #{bert_classifier_forward.1} parent=39 // pred_check_branch
        %311 = sbr.rel (%p309) target = $region48
      $region47: #{bert_classifier_forward.1} parent=39 // pred_region
        %p312 = scmp.lt.s32.totalorder %s22, 1
        %s313 = scalar_select %p312, %s22, 1
        %p314 = scmp.lt.s32.totalorder %s23, 1
        %s315 = scalar_select %p314, %s23, 1
        %s316 = smul.addr %s313, 2
        %s317 = sadd.s32 %s315, %s316
        %s318 = smul.addr %s317, 8
        %s319 = scalar_lea.vmem %s1, %s318
      $region48: #{bert_classifier_forward.1} parent=39 // pred_fallthru
        _
      // Predicated region
      $region49: #{bert_classifier_forward.1} parent=39 // pred_check
        %p320 = pneg %p103
      $region50: #{bert_classifier_forward.1} parent=39 // pred_check_branch
        %322 = sbr.rel (%p320) target = $region52
      $region51: #{bert_classifier_forward.1} parent=39 // pred_region
        %p323 = scmp.lt.s32.totalorder %s22, 1
        %s324 = scalar_select %p323, %s22, 1
        %s325 = smul.addr %s324, 8
        %s326 = scalar_lea.vmem %s2, %s325
      $region52: #{bert_classifier_forward.1} parent=39 // pred_fallthru
        _
    $region40: #{bert_classifier_forward.1} parent=5 // pred_fallthru
      _
    %p327 = scmp.le.s32.totalorder 1, %s15
    %p328 = scmp.lt.s32.totalorder %s15, 5
    %p329 = pnand %p327, %p328
    %p330 = pneg %p329
    // Predicated region
    $region53: #{bert_classifier_forward.1} parent=5 // pred_check
      _
    $region54: #{bert_classifier_forward.1} parent=5 // pred_check_branch
      %332 = sbr.rel (%p329) target = $region56
    $region55: #{bert_classifier_forward.1} parent=5 // pred_region
      %s333 = ssub.s32 %s15, 1
      %p334 = scmp.lt.s32.totalorder %s24, 1
      %s335 = scalar_select %p334, %s24, 1
      %p336 = scmp.lt.s32.totalorder %s25, 1
      %s337 = scalar_select %p336, %s25, 1
      %s338 = smul.addr %s335, 2
      %s339 = sadd.s32 %s337, %s338
      %s340 = smul.addr %s339, 8
      %s341 = scalar_lea.vmem %s0, %s340
      %p342 = pneg %p55
      %p343 = pneg %p52
      %p344 = scmp.lt.s32.totalorder %s24, 1
      %s345 = scalar_select %p344, %s24, 1
      %p346 = scmp.lt.s32.totalorder %s25, 1
      %s347 = scalar_select %p346, %s25, 1
      %s348 = smul.addr %s345, 2
      %s349 = sadd.s32 %s347, %s348
      %s350 = smul.addr %s349, 8
      %s351 = scalar_lea.vmem %s1, %s350
      %p352 = pneg %p83
      %p353 = pneg %p80
      %p354 = scmp.lt.s32.totalorder %s24, 1
      %s355 = scalar_select %p354, %s24, 1
      %s356 = smul.addr %s355, 8
      %s357 = scalar_lea.vmem %s2, %s356
      %p358 = pneg %p109
      %p359 = pneg %p106
      %p360 = pneg %p130
      %p361 = pneg %p127
      %p362 = pneg %p151
      %p363 = pneg %p148
      %p364 = pneg %p172
      %p365 = pneg %p169
      %p366 = pneg %p193
      %p367 = pneg %p190
      %p368 = pneg %p214
      %p369 = pneg %p211
      %p370 = pneg %p235
      %p371 = pneg %p232
      %p372 = pneg %p261
      %p373 = pneg %p258
      %p374 = scmp.lt.s32.totalorder %s24, 1
      %s375 = scalar_select %p374, %s24, 1
      %s376 = smul.addr %s375, 8
      %s377 = scalar_lea.vmem %s9, %s376
      %p378 = scmp.lt.s32.totalorder %s24, 1
      %s379 = scalar_select %p378, %s24, 1
      %p380 = scmp.lt.s32.totalorder %s25, 1
      %s381 = scalar_select %p380, %s25, 1
      %s382 = smul.addr %s379, 2
      %s383 = sadd.s32 %s381, %s382
      %s384 = smul.addr %s383, 8
      %s385 = scalar_lea.vmem %s0, %s384
      %p386 = scmp.lt.s32.totalorder %s24, 1
      %s387 = scalar_select %p386, %s24, 1
      %p388 = scmp.lt.s32.totalorder %s25, 1
      %s389 = scalar_select %p388, %s25, 1
      %s390 = smul.addr %s387, 2
      %s391 = sadd.s32 %s389, %s390
      %s392 = smul.addr %s391, 8
      %s393 = scalar_lea.vmem %s1, %s392
      %p394 = scmp.lt.s32.totalorder %s24, 1
      %s395 = scalar_select %p394, %s24, 1
      %s396 = smul.addr %s395, 8
      %s397 = scalar_lea.vmem %s2, %s396
      %p398 = scmp.lt.s32.totalorder %s24, 1
      %s399 = scalar_select %p398, %s24, 1
      %s400 = smul.addr %s399, 8
      %s401 = scalar_lea.vmem %s9, %s400
      %p403 = scmp.eq.s32.totalorder %s25, 0
      // Predicated region
      $region57: #{bert_classifier_forward.1} parent=55 // pred_check
        %p404 = pneg %p403
      $region58: #{bert_classifier_forward.1} parent=55 // pred_check_branch
        %406 = sbr.rel (%p404) target = $region60
      $region59: #{bert_classifier_forward.1} parent=55 // pred_region
        %vm407 = vcmask 523264
        %408 = vst.msk [vmem:[#allocation2] sm:$0xff] %vm407, 0.0
      $region60: #{bert_classifier_forward.1} parent=55 // pred_fallthru
        _
      %v409 = vld [vmem:[%s397] sm:$0xff]
      %s410 = smul.u32 %s25, 128
      %v411 = vlaneseq
      %v412 = vand.u32 %v411, 127
      %v413 = vstv %s410
      %v414 = vadd.s32 %v413, %v412
      %415 = vset.pattern.permute.xlu0 0
      %416 = vperm.xlu0 %415, %v409
      %v417 = vpop.permute.xlu0 %416
      %vm418 = vcmp.lt.s32.totalorder %v414, %v417
      %v419 = vsel %vm418, 1, 0
      %v420 = vcvt.s32.f32 %v419
      %v421 = vld [vmem:[%s385] sm:$0xff]
      %v422 = vlaneseq
      %v423 = vshrl.u32 %v422, 7
      %v424 = vsub.s32 0, %v423
      %v425 = vrot.slane %v421, %v424
      %427 = vbcast.lane.b32.xlu0 %v425, 256
      %v428 = vpop.permute.xlu0 %427
      %s430 = sor.u32 256, 8
      %431 = vbcast.lane.b32.xlu0 %v425, %s430
      %v432 = vpop.permute.xlu0 %431
      %s434 = sor.u32 256, 16
      %435 = vbcast.lane.b32.xlu0 %v425, %s434
      %v436 = vpop.permute.xlu0 %435
      %s438 = sor.u32 256, 24
      %439 = vbcast.lane.b32.xlu0 %v425, %s438
      %v440 = vpop.permute.xlu0 %439
      %s442 = sor.u32 256, 32
      %443 = vbcast.lane.b32.xlu0 %v425, %s442
      %v444 = vpop.permute.xlu0 %443
      %s446 = sor.u32 256, 40
      %447 = vbcast.lane.b32.xlu0 %v425, %s446
      %v448 = vpop.permute.xlu0 %447
      %s450 = sor.u32 256, 48
      %451 = vbcast.lane.b32.xlu0 %v425, %s450
      %v452 = vpop.permute.xlu0 %451
      %s454 = sor.u32 256, 56
      %455 = vbcast.lane.b32.xlu0 %v425, %s454
      %v456 = vpop.permute.xlu0 %455
      %s458 = sor.u32 256, 64
      %459 = vbcast.lane.b32.xlu0 %v425, %s458
      %v460 = vpop.permute.xlu0 %459
      %s462 = sor.u32 256, 72
      %463 = vbcast.lane.b32.xlu0 %v425, %s462
      %v464 = vpop.permute.xlu0 %463
      %s466 = sor.u32 256, 80
      %467 = vbcast.lane.b32.xlu0 %v425, %s466
      %v468 = vpop.permute.xlu0 %467
      %s470 = sor.u32 256, 88
      %471 = vbcast.lane.b32.xlu0 %v425, %s470
      %v472 = vpop.permute.xlu0 %471
      %s474 = sor.u32 256, 96
      %475 = vbcast.lane.b32.xlu0 %v425, %s474
      %v476 = vpop.permute.xlu0 %475
      %s478 = sor.u32 256, 104
      %479 = vbcast.lane.b32.xlu0 %v425, %s478
      %v480 = vpop.permute.xlu0 %479
      %s482 = sor.u32 256, 112
      %483 = vbcast.lane.b32.xlu0 %v425, %s482
      %v484 = vpop.permute.xlu0 %483
      %s486 = sor.u32 256, 120
      %487 = vbcast.lane.b32.xlu0 %v425, %s486
      %v488 = vpop.permute.xlu0 %487
      %v489 = vlaneseq
      %v490 = vshrl.u32 %v489, 7
      %v491 = vsub.s32 1, %v490
      %v492 = vrot.slane %v421, %v491
      %494 = vbcast.lane.b32.xlu0 %v492, 256
      %v495 = vpop.permute.xlu0 %494
      %s497 = sor.u32 256, 8
      %498 = vbcast.lane.b32.xlu0 %v492, %s497
      %v499 = vpop.permute.xlu0 %498
      %s501 = sor.u32 256, 16
      %502 = vbcast.lane.b32.xlu0 %v492, %s501
      %v503 = vpop.permute.xlu0 %502
      %s505 = sor.u32 256, 24
      %506 = vbcast.lane.b32.xlu0 %v492, %s505
      %v507 = vpop.permute.xlu0 %506
      %s509 = sor.u32 256, 32
      %510 = vbcast.lane.b32.xlu0 %v492, %s509
      %v511 = vpop.permute.xlu0 %510
      %s513 = sor.u32 256, 40
      %514 = vbcast.lane.b32.xlu0 %v492, %s513
      %v515 = vpop.permute.xlu0 %514
      %s517 = sor.u32 256, 48
      %518 = vbcast.lane.b32.xlu0 %v492, %s517
      %v519 = vpop.permute.xlu0 %518
      %s521 = sor.u32 256, 56
      %522 = vbcast.lane.b32.xlu0 %v492, %s521
      %v523 = vpop.permute.xlu0 %522
      %s525 = sor.u32 256, 64
      %526 = vbcast.lane.b32.xlu0 %v492, %s525
      %v527 = vpop.permute.xlu0 %526
      %s529 = sor.u32 256, 72
      %530 = vbcast.lane.b32.xlu0 %v492, %s529
      %v531 = vpop.permute.xlu0 %530
      %s533 = sor.u32 256, 80
      %534 = vbcast.lane.b32.xlu0 %v492, %s533
      %v535 = vpop.permute.xlu0 %534
      %s537 = sor.u32 256, 88
      %538 = vbcast.lane.b32.xlu0 %v492, %s537
      %v539 = vpop.permute.xlu0 %538
      %s541 = sor.u32 256, 96
      %542 = vbcast.lane.b32.xlu0 %v492, %s541
      %v543 = vpop.permute.xlu0 %542
      %s545 = sor.u32 256, 104
      %546 = vbcast.lane.b32.xlu0 %v492, %s545
      %v547 = vpop.permute.xlu0 %546
      %s549 = sor.u32 256, 112
      %550 = vbcast.lane.b32.xlu0 %v492, %s549
      %v551 = vpop.permute.xlu0 %550
      %s553 = sor.u32 256, 120
      %554 = vbcast.lane.b32.xlu0 %v492, %s553
      %v555 = vpop.permute.xlu0 %554
      %v556 = vlaneseq
      %v557 = vshrl.u32 %v556, 7
      %v558 = vsub.s32 2, %v557
      %v559 = vrot.slane %v421, %v558
      %561 = vbcast.lane.b32.xlu0 %v559, 256
      %v562 = vpop.permute.xlu0 %561
      %s564 = sor.u32 256, 8
      %565 = vbcast.lane.b32.xlu0 %v559, %s564
      %v566 = vpop.permute.xlu0 %565
      %s568 = sor.u32 256, 16
      %569 = vbcast.lane.b32.xlu0 %v559, %s568
      %v570 = vpop.permute.xlu0 %569
      %s572 = sor.u32 256, 24
      %573 = vbcast.lane.b32.xlu0 %v559, %s572
      %v574 = vpop.permute.xlu0 %573
      %s576 = sor.u32 256, 32
      %577 = vbcast.lane.b32.xlu0 %v559, %s576
      %v578 = vpop.permute.xlu0 %577
      %s580 = sor.u32 256, 40
      %581 = vbcast.lane.b32.xlu0 %v559, %s580
      %v582 = vpop.permute.xlu0 %581
      %s584 = sor.u32 256, 48
      %585 = vbcast.lane.b32.xlu0 %v559, %s584
      %v586 = vpop.permute.xlu0 %585
      %s588 = sor.u32 256, 56
      %589 = vbcast.lane.b32.xlu0 %v559, %s588
      %v590 = vpop.permute.xlu0 %589
      %s592 = sor.u32 256, 64
      %593 = vbcast.lane.b32.xlu0 %v559, %s592
      %v594 = vpop.permute.xlu0 %593
      %s596 = sor.u32 256, 72
      %597 = vbcast.lane.b32.xlu0 %v559, %s596
      %v598 = vpop.permute.xlu0 %597
      %s600 = sor.u32 256, 80
      %601 = vbcast.lane.b32.xlu0 %v559, %s600
      %v602 = vpop.permute.xlu0 %601
      %s604 = sor.u32 256, 88
      %605 = vbcast.lane.b32.xlu0 %v559, %s604
      %v606 = vpop.permute.xlu0 %605
      %s608 = sor.u32 256, 96
      %609 = vbcast.lane.b32.xlu0 %v559, %s608
      %v610 = vpop.permute.xlu0 %609
      %s612 = sor.u32 256, 104
      %613 = vbcast.lane.b32.xlu0 %v559, %s612
      %v614 = vpop.permute.xlu0 %613
      %s616 = sor.u32 256, 112
      %617 = vbcast.lane.b32.xlu0 %v559, %s616
      %v618 = vpop.permute.xlu0 %617
      %s620 = sor.u32 256, 120
      %621 = vbcast.lane.b32.xlu0 %v559, %s620
      %v622 = vpop.permute.xlu0 %621
      %v623 = vlaneseq
      %v624 = vshrl.u32 %v623, 7
      %v625 = vsub.s32 3, %v624
      %v626 = vrot.slane %v421, %v625
      %628 = vbcast.lane.b32.xlu0 %v626, 256
      %v629 = vpop.permute.xlu0 %628
      %s631 = sor.u32 256, 8
      %632 = vbcast.lane.b32.xlu0 %v626, %s631
      %v633 = vpop.permute.xlu0 %632
      %s635 = sor.u32 256, 16
      %636 = vbcast.lane.b32.xlu0 %v626, %s635
      %v637 = vpop.permute.xlu0 %636
      %s639 = sor.u32 256, 24
      %640 = vbcast.lane.b32.xlu0 %v626, %s639
      %v641 = vpop.permute.xlu0 %640
      %s643 = sor.u32 256, 32
      %644 = vbcast.lane.b32.xlu0 %v626, %s643
      %v645 = vpop.permute.xlu0 %644
      %s647 = sor.u32 256, 40
      %648 = vbcast.lane.b32.xlu0 %v626, %s647
      %v649 = vpop.permute.xlu0 %648
      %s651 = sor.u32 256, 48
      %652 = vbcast.lane.b32.xlu0 %v626, %s651
      %v653 = vpop.permute.xlu0 %652
      %s655 = sor.u32 256, 56
      %656 = vbcast.lane.b32.xlu0 %v626, %s655
      %v657 = vpop.permute.xlu0 %656
      %s659 = sor.u32 256, 64
      %660 = vbcast.lane.b32.xlu0 %v626, %s659
      %v661 = vpop.permute.xlu0 %660
      %s663 = sor.u32 256, 72
      %664 = vbcast.lane.b32.xlu0 %v626, %s663
      %v665 = vpop.permute.xlu0 %664
      %s667 = sor.u32 256, 80
      %668 = vbcast.lane.b32.xlu0 %v626, %s667
      %v669 = vpop.permute.xlu0 %668
      %s671 = sor.u32 256, 88
      %672 = vbcast.lane.b32.xlu0 %v626, %s671
      %v673 = vpop.permute.xlu0 %672
      %s675 = sor.u32 256, 96
      %676 = vbcast.lane.b32.xlu0 %v626, %s675
      %v677 = vpop.permute.xlu0 %676
      %s679 = sor.u32 256, 104
      %680 = vbcast.lane.b32.xlu0 %v626, %s679
      %v681 = vpop.permute.xlu0 %680
      %s683 = sor.u32 256, 112
      %684 = vbcast.lane.b32.xlu0 %v626, %s683
      %v685 = vpop.permute.xlu0 %684
      %s687 = sor.u32 256, 120
      %688 = vbcast.lane.b32.xlu0 %v626, %s687
      %v689 = vpop.permute.xlu0 %688
      %v690 = vlaneseq
      %v691 = vshrl.u32 %v690, 7
      %v692 = vsub.s32 4, %v691
      %v693 = vrot.slane %v421, %v692
      %695 = vbcast.lane.b32.xlu0 %v693, 256
      %v696 = vpop.permute.xlu0 %695
      %s698 = sor.u32 256, 8
      %699 = vbcast.lane.b32.xlu0 %v693, %s698
      %v700 = vpop.permute.xlu0 %699
      %s702 = sor.u32 256, 16
      %703 = vbcast.lane.b32.xlu0 %v693, %s702
      %v704 = vpop.permute.xlu0 %703
      %s706 = sor.u32 256, 24
      %707 = vbcast.lane.b32.xlu0 %v693, %s706
      %v708 = vpop.permute.xlu0 %707
      %s710 = sor.u32 256, 32
      %711 = vbcast.lane.b32.xlu0 %v693, %s710
      %v712 = vpop.permute.xlu0 %711
      %s714 = sor.u32 256, 40
      %715 = vbcast.lane.b32.xlu0 %v693, %s714
      %v716 = vpop.permute.xlu0 %715
      %s718 = sor.u32 256, 48
      %719 = vbcast.lane.b32.xlu0 %v693, %s718
      %v720 = vpop.permute.xlu0 %719
      %s722 = sor.u32 256, 56
      %723 = vbcast.lane.b32.xlu0 %v693, %s722
      %v724 = vpop.permute.xlu0 %723
      %s726 = sor.u32 256, 64
      %727 = vbcast.lane.b32.xlu0 %v693, %s726
      %v728 = vpop.permute.xlu0 %727
      %s730 = sor.u32 256, 72
      %731 = vbcast.lane.b32.xlu0 %v693, %s730
      %v732 = vpop.permute.xlu0 %731
      %s734 = sor.u32 256, 80
      %735 = vbcast.lane.b32.xlu0 %v693, %s734
      %v736 = vpop.permute.xlu0 %735
      %s738 = sor.u32 256, 88
      %739 = vbcast.lane.b32.xlu0 %v693, %s738
      %v740 = vpop.permute.xlu0 %739
      %s742 = sor.u32 256, 96
      %743 = vbcast.lane.b32.xlu0 %v693, %s742
      %v744 = vpop.permute.xlu0 %743
      %s746 = sor.u32 256, 104
      %747 = vbcast.lane.b32.xlu0 %v693, %s746
      %v748 = vpop.permute.xlu0 %747
      %s750 = sor.u32 256, 112
      %751 = vbcast.lane.b32.xlu0 %v693, %s750
      %v752 = vpop.permute.xlu0 %751
      %s754 = sor.u32 256, 120
      %755 = vbcast.lane.b32.xlu0 %v693, %s754
      %v756 = vpop.permute.xlu0 %755
      %v757 = vlaneseq
      %v758 = vshrl.u32 %v757, 7
      %v759 = vsub.s32 5, %v758
      %v760 = vrot.slane %v421, %v759
      %762 = vbcast.lane.b32.xlu0 %v760, 256
      %v763 = vpop.permute.xlu0 %762
      %s765 = sor.u32 256, 8
      %766 = vbcast.lane.b32.xlu0 %v760, %s765
      %v767 = vpop.permute.xlu0 %766
      %s769 = sor.u32 256, 16
      %770 = vbcast.lane.b32.xlu0 %v760, %s769
      %v771 = vpop.permute.xlu0 %770
      %s773 = sor.u32 256, 24
      %774 = vbcast.lane.b32.xlu0 %v760, %s773
      %v775 = vpop.permute.xlu0 %774
      %s777 = sor.u32 256, 32
      %778 = vbcast.lane.b32.xlu0 %v760, %s777
      %v779 = vpop.permute.xlu0 %778
      %s781 = sor.u32 256, 40
      %782 = vbcast.lane.b32.xlu0 %v760, %s781
      %v783 = vpop.permute.xlu0 %782
      %s785 = sor.u32 256, 48
      %786 = vbcast.lane.b32.xlu0 %v760, %s785
      %v787 = vpop.permute.xlu0 %786
      %s789 = sor.u32 256, 56
      %790 = vbcast.lane.b32.xlu0 %v760, %s789
      %v791 = vpop.permute.xlu0 %790
      %s793 = sor.u32 256, 64
      %794 = vbcast.lane.b32.xlu0 %v760, %s793
      %v795 = vpop.permute.xlu0 %794
      %s797 = sor.u32 256, 72
      %798 = vbcast.lane.b32.xlu0 %v760, %s797
      %v799 = vpop.permute.xlu0 %798
      %s801 = sor.u32 256, 80
      %802 = vbcast.lane.b32.xlu0 %v760, %s801
      %v803 = vpop.permute.xlu0 %802
      %s805 = sor.u32 256, 88
      %806 = vbcast.lane.b32.xlu0 %v760, %s805
      %v807 = vpop.permute.xlu0 %806
      %s809 = sor.u32 256, 96
      %810 = vbcast.lane.b32.xlu0 %v760, %s809
      %v811 = vpop.permute.xlu0 %810
      %s813 = sor.u32 256, 104
      %814 = vbcast.lane.b32.xlu0 %v760, %s813
      %v815 = vpop.permute.xlu0 %814
      %s817 = sor.u32 256, 112
      %818 = vbcast.lane.b32.xlu0 %v760, %s817
      %v819 = vpop.permute.xlu0 %818
      %s821 = sor.u32 256, 120
      %822 = vbcast.lane.b32.xlu0 %v760, %s821
      %v823 = vpop.permute.xlu0 %822
      %v824 = vlaneseq
      %v825 = vshrl.u32 %v824, 7
      %v826 = vsub.s32 6, %v825
      %v827 = vrot.slane %v421, %v826
      %829 = vbcast.lane.b32.xlu0 %v827, 256
      %v830 = vpop.permute.xlu0 %829
      %s832 = sor.u32 256, 8
      %833 = vbcast.lane.b32.xlu0 %v827, %s832
      %v834 = vpop.permute.xlu0 %833
      %s836 = sor.u32 256, 16
      %837 = vbcast.lane.b32.xlu0 %v827, %s836
      %v838 = vpop.permute.xlu0 %837
      %s840 = sor.u32 256, 24
      %841 = vbcast.lane.b32.xlu0 %v827, %s840
      %v842 = vpop.permute.xlu0 %841
      %s844 = sor.u32 256, 32
      %845 = vbcast.lane.b32.xlu0 %v827, %s844
      %v846 = vpop.permute.xlu0 %845
      %s848 = sor.u32 256, 40
      %849 = vbcast.lane.b32.xlu0 %v827, %s848
      %v850 = vpop.permute.xlu0 %849
      %s852 = sor.u32 256, 48
      %853 = vbcast.lane.b32.xlu0 %v827, %s852
      %v854 = vpop.permute.xlu0 %853
      %s856 = sor.u32 256, 56
      %857 = vbcast.lane.b32.xlu0 %v827, %s856
      %v858 = vpop.permute.xlu0 %857
      %s860 = sor.u32 256, 64
      %861 = vbcast.lane.b32.xlu0 %v827, %s860
      %v862 = vpop.permute.xlu0 %861
      %s864 = sor.u32 256, 72
      %865 = vbcast.lane.b32.xlu0 %v827, %s864
      %v866 = vpop.permute.xlu0 %865
      %s868 = sor.u32 256, 80
      %869 = vbcast.lane.b32.xlu0 %v827, %s868
      %v870 = vpop.permute.xlu0 %869
      %s872 = sor.u32 256, 88
      %873 = vbcast.lane.b32.xlu0 %v827, %s872
      %v874 = vpop.permute.xlu0 %873
      %s876 = sor.u32 256, 96
      %877 = vbcast.lane.b32.xlu0 %v827, %s876
      %v878 = vpop.permute.xlu0 %877
      %s880 = sor.u32 256, 104
      %881 = vbcast.lane.b32.xlu0 %v827, %s880
      %v882 = vpop.permute.xlu0 %881
      %s884 = sor.u32 256, 112
      %885 = vbcast.lane.b32.xlu0 %v827, %s884
      %v886 = vpop.permute.xlu0 %885
      %s888 = sor.u32 256, 120
      %889 = vbcast.lane.b32.xlu0 %v827, %s888
      %v890 = vpop.permute.xlu0 %889
      %v891 = vlaneseq
      %v892 = vshrl.u32 %v891, 7
      %v893 = vsub.s32 7, %v892
      %v894 = vrot.slane %v421, %v893
      %896 = vbcast.lane.b32.xlu0 %v894, 256
      %v897 = vpop.permute.xlu0 %896
      %s899 = sor.u32 256, 8
      %900 = vbcast.lane.b32.xlu0 %v894, %s899
      %v901 = vpop.permute.xlu0 %900
      %s903 = sor.u32 256, 16
      %904 = vbcast.lane.b32.xlu0 %v894, %s903
      %v905 = vpop.permute.xlu0 %904
      %s907 = sor.u32 256, 24
      %908 = vbcast.lane.b32.xlu0 %v894, %s907
      %v909 = vpop.permute.xlu0 %908
      %s911 = sor.u32 256, 32
      %912 = vbcast.lane.b32.xlu0 %v894, %s911
      %v913 = vpop.permute.xlu0 %912
      %s915 = sor.u32 256, 40
      %916 = vbcast.lane.b32.xlu0 %v894, %s915
      %v917 = vpop.permute.xlu0 %916
      %s919 = sor.u32 256, 48
      %920 = vbcast.lane.b32.xlu0 %v894, %s919
      %v921 = vpop.permute.xlu0 %920
      %s923 = sor.u32 256, 56
      %924 = vbcast.lane.b32.xlu0 %v894, %s923
      %v925 = vpop.permute.xlu0 %924
      %s927 = sor.u32 256, 64
      %928 = vbcast.lane.b32.xlu0 %v894, %s927
      %v929 = vpop.permute.xlu0 %928
      %s931 = sor.u32 256, 72
      %932 = vbcast.lane.b32.xlu0 %v894, %s931
      %v933 = vpop.permute.xlu0 %932
      %s935 = sor.u32 256, 80
      %936 = vbcast.lane.b32.xlu0 %v894, %s935
      %v937 = vpop.permute.xlu0 %936
      %s939 = sor.u32 256, 88
      %940 = vbcast.lane.b32.xlu0 %v894, %s939
      %v941 = vpop.permute.xlu0 %940
      %s943 = sor.u32 256, 96
      %944 = vbcast.lane.b32.xlu0 %v894, %s943
      %v945 = vpop.permute.xlu0 %944
      %s947 = sor.u32 256, 104
      %948 = vbcast.lane.b32.xlu0 %v894, %s947
      %v949 = vpop.permute.xlu0 %948
      %s951 = sor.u32 256, 112
      %952 = vbcast.lane.b32.xlu0 %v894, %s951
      %v953 = vpop.permute.xlu0 %952
      %s955 = sor.u32 256, 120
      %956 = vbcast.lane.b32.xlu0 %v894, %s955
      %v957 = vpop.permute.xlu0 %956
      %vm958 = vcmp.eq.s32.totalorder %v428, %v412
      %vm959 = vcmp.eq.s32.totalorder %v432, %v412
      %vm960 = vcmp.eq.s32.totalorder %v436, %v412
      %vm961 = vcmp.eq.s32.totalorder %v440, %v412
      %vm962 = vcmp.eq.s32.totalorder %v444, %v412
      %vm963 = vcmp.eq.s32.totalorder %v448, %v412
      %vm964 = vcmp.eq.s32.totalorder %v452, %v412
      %vm965 = vcmp.eq.s32.totalorder %v456, %v412
      %vm966 = vcmp.eq.s32.totalorder %v460, %v412
      %vm967 = vcmp.eq.s32.totalorder %v464, %v412
      %vm968 = vcmp.eq.s32.totalorder %v468, %v412
      %vm969 = vcmp.eq.s32.totalorder %v472, %v412
      %vm970 = vcmp.eq.s32.totalorder %v476, %v412
      %vm971 = vcmp.eq.s32.totalorder %v480, %v412
      %vm972 = vcmp.eq.s32.totalorder %v484, %v412
      %vm973 = vcmp.eq.s32.totalorder %v488, %v412
      %vm974 = vcmp.eq.s32.totalorder %v495, %v412
      %vm975 = vcmp.eq.s32.totalorder %v499, %v412
      %vm976 = vcmp.eq.s32.totalorder %v503, %v412
      %vm977 = vcmp.eq.s32.totalorder %v507, %v412
      %vm978 = vcmp.eq.s32.totalorder %v511, %v412
      %vm979 = vcmp.eq.s32.totalorder %v515, %v412
      %vm980 = vcmp.eq.s32.totalorder %v519, %v412
      %vm981 = vcmp.eq.s32.totalorder %v523, %v412
      %vm982 = vcmp.eq.s32.totalorder %v527, %v412
      %vm983 = vcmp.eq.s32.totalorder %v531, %v412
      %vm984 = vcmp.eq.s32.totalorder %v535, %v412
      %vm985 = vcmp.eq.s32.totalorder %v539, %v412
      %vm986 = vcmp.eq.s32.totalorder %v543, %v412
      %vm987 = vcmp.eq.s32.totalorder %v547, %v412
      %vm988 = vcmp.eq.s32.totalorder %v551, %v412
      %vm989 = vcmp.eq.s32.totalorder %v555, %v412
      %vm990 = vcmp.eq.s32.totalorder %v562, %v412
      %vm991 = vcmp.eq.s32.totalorder %v566, %v412
      %vm992 = vcmp.eq.s32.totalorder %v570, %v412
      %vm993 = vcmp.eq.s32.totalorder %v574, %v412
      %vm994 = vcmp.eq.s32.totalorder %v578, %v412
      %vm995 = vcmp.eq.s32.totalorder %v582, %v412
      %vm996 = vcmp.eq.s32.totalorder %v586, %v412
      %vm997 = vcmp.eq.s32.totalorder %v590, %v412
      %vm998 = vcmp.eq.s32.totalorder %v594, %v412
      %vm999 = vcmp.eq.s32.totalorder %v598, %v412
      %vm1000 = vcmp.eq.s32.totalorder %v602, %v412
      %vm1001 = vcmp.eq.s32.totalorder %v606, %v412
      %vm1002 = vcmp.eq.s32.totalorder %v610, %v412
      %vm1003 = vcmp.eq.s32.totalorder %v614, %v412
      %vm1004 = vcmp.eq.s32.totalorder %v618, %v412
      %vm1005 = vcmp.eq.s32.totalorder %v622, %v412
      %vm1006 = vcmp.eq.s32.totalorder %v629, %v412
      %vm1007 = vcmp.eq.s32.totalorder %v633, %v412
      %vm1008 = vcmp.eq.s32.totalorder %v637, %v412
      %vm1009 = vcmp.eq.s32.totalorder %v641, %v412
      %vm1010 = vcmp.eq.s32.totalorder %v645, %v412
      %vm1011 = vcmp.eq.s32.totalorder %v649, %v412
      %vm1012 = vcmp.eq.s32.totalorder %v653, %v412
      %vm1013 = vcmp.eq.s32.totalorder %v657, %v412
      %vm1014 = vcmp.eq.s32.totalorder %v661, %v412
      %vm1015 = vcmp.eq.s32.totalorder %v665, %v412
      %vm1016 = vcmp.eq.s32.totalorder %v669, %v412
      %vm1017 = vcmp.eq.s32.totalorder %v673, %v412
      %vm1018 = vcmp.eq.s32.totalorder %v677, %v412
      %vm1019 = vcmp.eq.s32.totalorder %v681, %v412
      %vm1020 = vcmp.eq.s32.totalorder %v685, %v412
      %vm1021 = vcmp.eq.s32.totalorder %v689, %v412
      %vm1022 = vcmp.eq.s32.totalorder %v696, %v412
      %vm1023 = vcmp.eq.s32.totalorder %v700, %v412
      %vm1024 = vcmp.eq.s32.totalorder %v704, %v412
      %vm1025 = vcmp.eq.s32.totalorder %v708, %v412
      %vm1026 = vcmp.eq.s32.totalorder %v712, %v412
      %vm1027 = vcmp.eq.s32.totalorder %v716, %v412
      %vm1028 = vcmp.eq.s32.totalorder %v720, %v412
      %vm1029 = vcmp.eq.s32.totalorder %v724, %v412
      %vm1030 = vcmp.eq.s32.totalorder %v728, %v412
      %vm1031 = vcmp.eq.s32.totalorder %v732, %v412
      %vm1032 = vcmp.eq.s32.totalorder %v736, %v412
      %vm1033 = vcmp.eq.s32.totalorder %v740, %v412
      %vm1034 = vcmp.eq.s32.totalorder %v744, %v412
      %vm1035 = vcmp.eq.s32.totalorder %v748, %v412
      %vm1036 = vcmp.eq.s32.totalorder %v752, %v412
      %vm1037 = vcmp.eq.s32.totalorder %v756, %v412
      %vm1038 = vcmp.eq.s32.totalorder %v763, %v412
      %vm1039 = vcmp.eq.s32.totalorder %v767, %v412
      %vm1040 = vcmp.eq.s32.totalorder %v771, %v412
      %vm1041 = vcmp.eq.s32.totalorder %v775, %v412
      %vm1042 = vcmp.eq.s32.totalorder %v779, %v412
      %vm1043 = vcmp.eq.s32.totalorder %v783, %v412
      %vm1044 = vcmp.eq.s32.totalorder %v787, %v412
      %vm1045 = vcmp.eq.s32.totalorder %v791, %v412
      %vm1046 = vcmp.eq.s32.totalorder %v795, %v412
      %vm1047 = vcmp.eq.s32.totalorder %v799, %v412
      %vm1048 = vcmp.eq.s32.totalorder %v803, %v412
      %vm1049 = vcmp.eq.s32.totalorder %v807, %v412
      %vm1050 = vcmp.eq.s32.totalorder %v811, %v412
      %vm1051 = vcmp.eq.s32.totalorder %v815, %v412
      %vm1052 = vcmp.eq.s32.totalorder %v819, %v412
      %vm1053 = vcmp.eq.s32.totalorder %v823, %v412
      %vm1054 = vcmp.eq.s32.totalorder %v830, %v412
      %vm1055 = vcmp.eq.s32.totalorder %v834, %v412
      %vm1056 = vcmp.eq.s32.totalorder %v838, %v412
      %vm1057 = vcmp.eq.s32.totalorder %v842, %v412
      %vm1058 = vcmp.eq.s32.totalorder %v846, %v412
      %vm1059 = vcmp.eq.s32.totalorder %v850, %v412
      %vm1060 = vcmp.eq.s32.totalorder %v854, %v412
      %vm1061 = vcmp.eq.s32.totalorder %v858, %v412
      %vm1062 = vcmp.eq.s32.totalorder %v862, %v412
      %vm1063 = vcmp.eq.s32.totalorder %v866, %v412
      %vm1064 = vcmp.eq.s32.totalorder %v870, %v412
      %vm1065 = vcmp.eq.s32.totalorder %v874, %v412
      %vm1066 = vcmp.eq.s32.totalorder %v878, %v412
      %vm1067 = vcmp.eq.s32.totalorder %v882, %v412
      %vm1068 = vcmp.eq.s32.totalorder %v886, %v412
      %vm1069 = vcmp.eq.s32.totalorder %v890, %v412
      %vm1070 = vcmp.eq.s32.totalorder %v897, %v412
      %vm1071 = vcmp.eq.s32.totalorder %v901, %v412
      %vm1072 = vcmp.eq.s32.totalorder %v905, %v412
      %vm1073 = vcmp.eq.s32.totalorder %v909, %v412
      %vm1074 = vcmp.eq.s32.totalorder %v913, %v412
      %vm1075 = vcmp.eq.s32.totalorder %v917, %v412
      %vm1076 = vcmp.eq.s32.totalorder %v921, %v412
      %vm1077 = vcmp.eq.s32.totalorder %v925, %v412
      %vm1078 = vcmp.eq.s32.totalorder %v929, %v412
      %vm1079 = vcmp.eq.s32.totalorder %v933, %v412
      %vm1080 = vcmp.eq.s32.totalorder %v937, %v412
      %vm1081 = vcmp.eq.s32.totalorder %v941, %v412
      %vm1082 = vcmp.eq.s32.totalorder %v945, %v412
      %vm1083 = vcmp.eq.s32.totalorder %v949, %v412
      %vm1084 = vcmp.eq.s32.totalorder %v953, %v412
      %vm1085 = vcmp.eq.s32.totalorder %v957, %v412
      %v1086 = vlaneseq
      %v1087 = vshrl.u32 %v1086, 7
      %v1088 = vsub.s32 0, %v1087
      %v1089 = vrot.slane %v420, %v1088
      %1091 = vbcast.lane.b32.xlu0 %v1089, 256
      %v1092 = vpop.permute.xlu0 %1091
      %s1094 = sor.u32 256, 8
      %1095 = vbcast.lane.b32.xlu0 %v1089, %s1094
      %v1096 = vpop.permute.xlu0 %1095
      %s1098 = sor.u32 256, 16
      %1099 = vbcast.lane.b32.xlu0 %v1089, %s1098
      %v1100 = vpop.permute.xlu0 %1099
      %s1102 = sor.u32 256, 24
      %1103 = vbcast.lane.b32.xlu0 %v1089, %s1102
      %v1104 = vpop.permute.xlu0 %1103
      %s1106 = sor.u32 256, 32
      %1107 = vbcast.lane.b32.xlu0 %v1089, %s1106
      %v1108 = vpop.permute.xlu0 %1107
      %s1110 = sor.u32 256, 40
      %1111 = vbcast.lane.b32.xlu0 %v1089, %s1110
      %v1112 = vpop.permute.xlu0 %1111
      %s1114 = sor.u32 256, 48
      %1115 = vbcast.lane.b32.xlu0 %v1089, %s1114
      %v1116 = vpop.permute.xlu0 %1115
      %s1118 = sor.u32 256, 56
      %1119 = vbcast.lane.b32.xlu0 %v1089, %s1118
      %v1120 = vpop.permute.xlu0 %1119
      %s1122 = sor.u32 256, 64
      %1123 = vbcast.lane.b32.xlu0 %v1089, %s1122
      %v1124 = vpop.permute.xlu0 %1123
      %s1126 = sor.u32 256, 72
      %1127 = vbcast.lane.b32.xlu0 %v1089, %s1126
      %v1128 = vpop.permute.xlu0 %1127
      %s1130 = sor.u32 256, 80
      %1131 = vbcast.lane.b32.xlu0 %v1089, %s1130
      %v1132 = vpop.permute.xlu0 %1131
      %s1134 = sor.u32 256, 88
      %1135 = vbcast.lane.b32.xlu0 %v1089, %s1134
      %v1136 = vpop.permute.xlu0 %1135
      %s1138 = sor.u32 256, 96
      %1139 = vbcast.lane.b32.xlu0 %v1089, %s1138
      %v1140 = vpop.permute.xlu0 %1139
      %s1142 = sor.u32 256, 104
      %1143 = vbcast.lane.b32.xlu0 %v1089, %s1142
      %v1144 = vpop.permute.xlu0 %1143
      %s1146 = sor.u32 256, 112
      %1147 = vbcast.lane.b32.xlu0 %v1089, %s1146
      %v1148 = vpop.permute.xlu0 %1147
      %s1150 = sor.u32 256, 120
      %1151 = vbcast.lane.b32.xlu0 %v1089, %s1150
      %v1152 = vpop.permute.xlu0 %1151
      %v1153 = vlaneseq
      %v1154 = vshrl.u32 %v1153, 7
      %v1155 = vsub.s32 1, %v1154
      %v1156 = vrot.slane %v420, %v1155
      %1158 = vbcast.lane.b32.xlu0 %v1156, 256
      %v1159 = vpop.permute.xlu0 %1158
      %s1161 = sor.u32 256, 8
      %1162 = vbcast.lane.b32.xlu0 %v1156, %s1161
      %v1163 = vpop.permute.xlu0 %1162
      %s1165 = sor.u32 256, 16
      %1166 = vbcast.lane.b32.xlu0 %v1156, %s1165
      %v1167 = vpop.permute.xlu0 %1166
      %s1169 = sor.u32 256, 24
      %1170 = vbcast.lane.b32.xlu0 %v1156, %s1169
      %v1171 = vpop.permute.xlu0 %1170
      %s1173 = sor.u32 256, 32
      %1174 = vbcast.lane.b32.xlu0 %v1156, %s1173
      %v1175 = vpop.permute.xlu0 %1174
      %s1177 = sor.u32 256, 40
      %1178 = vbcast.lane.b32.xlu0 %v1156, %s1177
      %v1179 = vpop.permute.xlu0 %1178
      %s1181 = sor.u32 256, 48
      %1182 = vbcast.lane.b32.xlu0 %v1156, %s1181
      %v1183 = vpop.permute.xlu0 %1182
      %s1185 = sor.u32 256, 56
      %1186 = vbcast.lane.b32.xlu0 %v1156, %s1185
      %v1187 = vpop.permute.xlu0 %1186
      %s1189 = sor.u32 256, 64
      %1190 = vbcast.lane.b32.xlu0 %v1156, %s1189
      %v1191 = vpop.permute.xlu0 %1190
      %s1193 = sor.u32 256, 72
      %1194 = vbcast.lane.b32.xlu0 %v1156, %s1193
      %v1195 = vpop.permute.xlu0 %1194
      %s1197 = sor.u32 256, 80
      %1198 = vbcast.lane.b32.xlu0 %v1156, %s1197
      %v1199 = vpop.permute.xlu0 %1198
      %s1201 = sor.u32 256, 88
      %1202 = vbcast.lane.b32.xlu0 %v1156, %s1201
      %v1203 = vpop.permute.xlu0 %1202
      %s1205 = sor.u32 256, 96
      %1206 = vbcast.lane.b32.xlu0 %v1156, %s1205
      %v1207 = vpop.permute.xlu0 %1206
      %s1209 = sor.u32 256, 104
      %1210 = vbcast.lane.b32.xlu0 %v1156, %s1209
      %v1211 = vpop.permute.xlu0 %1210
      %s1213 = sor.u32 256, 112
      %1214 = vbcast.lane.b32.xlu0 %v1156, %s1213
      %v1215 = vpop.permute.xlu0 %1214
      %s1217 = sor.u32 256, 120
      %1218 = vbcast.lane.b32.xlu0 %v1156, %s1217
      %v1219 = vpop.permute.xlu0 %1218
      %v1220 = vlaneseq
      %v1221 = vshrl.u32 %v1220, 7
      %v1222 = vsub.s32 2, %v1221
      %v1223 = vrot.slane %v420, %v1222
      %1225 = vbcast.lane.b32.xlu0 %v1223, 256
      %v1226 = vpop.permute.xlu0 %1225
      %s1228 = sor.u32 256, 8
      %1229 = vbcast.lane.b32.xlu0 %v1223, %s1228
      %v1230 = vpop.permute.xlu0 %1229
      %s1232 = sor.u32 256, 16
      %1233 = vbcast.lane.b32.xlu0 %v1223, %s1232
      %v1234 = vpop.permute.xlu0 %1233
      %s1236 = sor.u32 256, 24
      %1237 = vbcast.lane.b32.xlu0 %v1223, %s1236
      %v1238 = vpop.permute.xlu0 %1237
      %s1240 = sor.u32 256, 32
      %1241 = vbcast.lane.b32.xlu0 %v1223, %s1240
      %v1242 = vpop.permute.xlu0 %1241
      %s1244 = sor.u32 256, 40
      %1245 = vbcast.lane.b32.xlu0 %v1223, %s1244
      %v1246 = vpop.permute.xlu0 %1245
      %s1248 = sor.u32 256, 48
      %1249 = vbcast.lane.b32.xlu0 %v1223, %s1248
      %v1250 = vpop.permute.xlu0 %1249
      %s1252 = sor.u32 256, 56
      %1253 = vbcast.lane.b32.xlu0 %v1223, %s1252
      %v1254 = vpop.permute.xlu0 %1253
      %s1256 = sor.u32 256, 64
      %1257 = vbcast.lane.b32.xlu0 %v1223, %s1256
      %v1258 = vpop.permute.xlu0 %1257
      %s1260 = sor.u32 256, 72
      %1261 = vbcast.lane.b32.xlu0 %v1223, %s1260
      %v1262 = vpop.permute.xlu0 %1261
      %s1264 = sor.u32 256, 80
      %1265 = vbcast.lane.b32.xlu0 %v1223, %s1264
      %v1266 = vpop.permute.xlu0 %1265
      %s1268 = sor.u32 256, 88
      %1269 = vbcast.lane.b32.xlu0 %v1223, %s1268
      %v1270 = vpop.permute.xlu0 %1269
      %s1272 = sor.u32 256, 96
      %1273 = vbcast.lane.b32.xlu0 %v1223, %s1272
      %v1274 = vpop.permute.xlu0 %1273
      %s1276 = sor.u32 256, 104
      %1277 = vbcast.lane.b32.xlu0 %v1223, %s1276
      %v1278 = vpop.permute.xlu0 %1277
      %s1280 = sor.u32 256, 112
      %1281 = vbcast.lane.b32.xlu0 %v1223, %s1280
      %v1282 = vpop.permute.xlu0 %1281
      %s1284 = sor.u32 256, 120
      %1285 = vbcast.lane.b32.xlu0 %v1223, %s1284
      %v1286 = vpop.permute.xlu0 %1285
      %v1287 = vlaneseq
      %v1288 = vshrl.u32 %v1287, 7
      %v1289 = vsub.s32 3, %v1288
      %v1290 = vrot.slane %v420, %v1289
      %1292 = vbcast.lane.b32.xlu0 %v1290, 256
      %v1293 = vpop.permute.xlu0 %1292
      %s1295 = sor.u32 256, 8
      %1296 = vbcast.lane.b32.xlu0 %v1290, %s1295
      %v1297 = vpop.permute.xlu0 %1296
      %s1299 = sor.u32 256, 16
      %1300 = vbcast.lane.b32.xlu0 %v1290, %s1299
      %v1301 = vpop.permute.xlu0 %1300
      %s1303 = sor.u32 256, 24
      %1304 = vbcast.lane.b32.xlu0 %v1290, %s1303
      %v1305 = vpop.permute.xlu0 %1304
      %s1307 = sor.u32 256, 32
      %1308 = vbcast.lane.b32.xlu0 %v1290, %s1307
      %v1309 = vpop.permute.xlu0 %1308
      %s1311 = sor.u32 256, 40
      %1312 = vbcast.lane.b32.xlu0 %v1290, %s1311
      %v1313 = vpop.permute.xlu0 %1312
      %s1315 = sor.u32 256, 48
      %1316 = vbcast.lane.b32.xlu0 %v1290, %s1315
      %v1317 = vpop.permute.xlu0 %1316
      %s1319 = sor.u32 256, 56
      %1320 = vbcast.lane.b32.xlu0 %v1290, %s1319
      %v1321 = vpop.permute.xlu0 %1320
      %s1323 = sor.u32 256, 64
      %1324 = vbcast.lane.b32.xlu0 %v1290, %s1323
      %v1325 = vpop.permute.xlu0 %1324
      %s1327 = sor.u32 256, 72
      %1328 = vbcast.lane.b32.xlu0 %v1290, %s1327
      %v1329 = vpop.permute.xlu0 %1328
      %s1331 = sor.u32 256, 80
      %1332 = vbcast.lane.b32.xlu0 %v1290, %s1331
      %v1333 = vpop.permute.xlu0 %1332
      %s1335 = sor.u32 256, 88
      %1336 = vbcast.lane.b32.xlu0 %v1290, %s1335
      %v1337 = vpop.permute.xlu0 %1336
      %s1339 = sor.u32 256, 96
      %1340 = vbcast.lane.b32.xlu0 %v1290, %s1339
      %v1341 = vpop.permute.xlu0 %1340
      %s1343 = sor.u32 256, 104
      %1344 = vbcast.lane.b32.xlu0 %v1290, %s1343
      %v1345 = vpop.permute.xlu0 %1344
      %s1347 = sor.u32 256, 112
      %1348 = vbcast.lane.b32.xlu0 %v1290, %s1347
      %v1349 = vpop.permute.xlu0 %1348
      %s1351 = sor.u32 256, 120
      %1352 = vbcast.lane.b32.xlu0 %v1290, %s1351
      %v1353 = vpop.permute.xlu0 %1352
      %v1354 = vlaneseq
      %v1355 = vshrl.u32 %v1354, 7
      %v1356 = vsub.s32 4, %v1355
      %v1357 = vrot.slane %v420, %v1356
      %1359 = vbcast.lane.b32.xlu0 %v1357, 256
      %v1360 = vpop.permute.xlu0 %1359
      %s1362 = sor.u32 256, 8
      %1363 = vbcast.lane.b32.xlu0 %v1357, %s1362
      %v1364 = vpop.permute.xlu0 %1363
      %s1366 = sor.u32 256, 16
      %1367 = vbcast.lane.b32.xlu0 %v1357, %s1366
      %v1368 = vpop.permute.xlu0 %1367
      %s1370 = sor.u32 256, 24
      %1371 = vbcast.lane.b32.xlu0 %v1357, %s1370
      %v1372 = vpop.permute.xlu0 %1371
      %s1374 = sor.u32 256, 32
      %1375 = vbcast.lane.b32.xlu0 %v1357, %s1374
      %v1376 = vpop.permute.xlu0 %1375
      %s1378 = sor.u32 256, 40
      %1379 = vbcast.lane.b32.xlu0 %v1357, %s1378
      %v1380 = vpop.permute.xlu0 %1379
      %s1382 = sor.u32 256, 48
      %1383 = vbcast.lane.b32.xlu0 %v1357, %s1382
      %v1384 = vpop.permute.xlu0 %1383
      %s1386 = sor.u32 256, 56
      %1387 = vbcast.lane.b32.xlu0 %v1357, %s1386
      %v1388 = vpop.permute.xlu0 %1387
      %s1390 = sor.u32 256, 64
      %1391 = vbcast.lane.b32.xlu0 %v1357, %s1390
      %v1392 = vpop.permute.xlu0 %1391
      %s1394 = sor.u32 256, 72
      %1395 = vbcast.lane.b32.xlu0 %v1357, %s1394
      %v1396 = vpop.permute.xlu0 %1395
      %s1398 = sor.u32 256, 80
      %1399 = vbcast.lane.b32.xlu0 %v1357, %s1398
      %v1400 = vpop.permute.xlu0 %1399
      %s1402 = sor.u32 256, 88
      %1403 = vbcast.lane.b32.xlu0 %v1357, %s1402
      %v1404 = vpop.permute.xlu0 %1403
      %s1406 = sor.u32 256, 96
      %1407 = vbcast.lane.b32.xlu0 %v1357, %s1406
      %v1408 = vpop.permute.xlu0 %1407
      %s1410 = sor.u32 256, 104
      %1411 = vbcast.lane.b32.xlu0 %v1357, %s1410
      %v1412 = vpop.permute.xlu0 %1411
      %s1414 = sor.u32 256, 112
      %1415 = vbcast.lane.b32.xlu0 %v1357, %s1414
      %v1416 = vpop.permute.xlu0 %1415
      %s1418 = sor.u32 256, 120
      %1419 = vbcast.lane.b32.xlu0 %v1357, %s1418
      %v1420 = vpop.permute.xlu0 %1419
      %v1421 = vlaneseq
      %v1422 = vshrl.u32 %v1421, 7
      %v1423 = vsub.s32 5, %v1422
      %v1424 = vrot.slane %v420, %v1423
      %1426 = vbcast.lane.b32.xlu0 %v1424, 256
      %v1427 = vpop.permute.xlu0 %1426
      %s1429 = sor.u32 256, 8
      %1430 = vbcast.lane.b32.xlu0 %v1424, %s1429
      %v1431 = vpop.permute.xlu0 %1430
      %s1433 = sor.u32 256, 16
      %1434 = vbcast.lane.b32.xlu0 %v1424, %s1433
      %v1435 = vpop.permute.xlu0 %1434
      %s1437 = sor.u32 256, 24
      %1438 = vbcast.lane.b32.xlu0 %v1424, %s1437
      %v1439 = vpop.permute.xlu0 %1438
      %s1441 = sor.u32 256, 32
      %1442 = vbcast.lane.b32.xlu0 %v1424, %s1441
      %v1443 = vpop.permute.xlu0 %1442
      %s1445 = sor.u32 256, 40
      %1446 = vbcast.lane.b32.xlu0 %v1424, %s1445
      %v1447 = vpop.permute.xlu0 %1446
      %s1449 = sor.u32 256, 48
      %1450 = vbcast.lane.b32.xlu0 %v1424, %s1449
      %v1451 = vpop.permute.xlu0 %1450
      %s1453 = sor.u32 256, 56
      %1454 = vbcast.lane.b32.xlu0 %v1424, %s1453
      %v1455 = vpop.permute.xlu0 %1454
      %s1457 = sor.u32 256, 64
      %1458 = vbcast.lane.b32.xlu0 %v1424, %s1457
      %v1459 = vpop.permute.xlu0 %1458
      %s1461 = sor.u32 256, 72
      %1462 = vbcast.lane.b32.xlu0 %v1424, %s1461
      %v1463 = vpop.permute.xlu0 %1462
      %s1465 = sor.u32 256, 80
      %1466 = vbcast.lane.b32.xlu0 %v1424, %s1465
      %v1467 = vpop.permute.xlu0 %1466
      %s1469 = sor.u32 256, 88
      %1470 = vbcast.lane.b32.xlu0 %v1424, %s1469
      %v1471 = vpop.permute.xlu0 %1470
      %s1473 = sor.u32 256, 96
      %1474 = vbcast.lane.b32.xlu0 %v1424, %s1473
      %v1475 = vpop.permute.xlu0 %1474
      %s1477 = sor.u32 256, 104
      %1478 = vbcast.lane.b32.xlu0 %v1424, %s1477
      %v1479 = vpop.permute.xlu0 %1478
      %s1481 = sor.u32 256, 112
      %1482 = vbcast.lane.b32.xlu0 %v1424, %s1481
      %v1483 = vpop.permute.xlu0 %1482
      %s1485 = sor.u32 256, 120
      %1486 = vbcast.lane.b32.xlu0 %v1424, %s1485
      %v1487 = vpop.permute.xlu0 %1486
      %v1488 = vlaneseq
      %v1489 = vshrl.u32 %v1488, 7
      %v1490 = vsub.s32 6, %v1489
      %v1491 = vrot.slane %v420, %v1490
      %1493 = vbcast.lane.b32.xlu0 %v1491, 256
      %v1494 = vpop.permute.xlu0 %1493
      %s1496 = sor.u32 256, 8
      %1497 = vbcast.lane.b32.xlu0 %v1491, %s1496
      %v1498 = vpop.permute.xlu0 %1497
      %s1500 = sor.u32 256, 16
      %1501 = vbcast.lane.b32.xlu0 %v1491, %s1500
      %v1502 = vpop.permute.xlu0 %1501
      %s1504 = sor.u32 256, 24
      %1505 = vbcast.lane.b32.xlu0 %v1491, %s1504
      %v1506 = vpop.permute.xlu0 %1505
      %s1508 = sor.u32 256, 32
      %1509 = vbcast.lane.b32.xlu0 %v1491, %s1508
      %v1510 = vpop.permute.xlu0 %1509
      %s1512 = sor.u32 256, 40
      %1513 = vbcast.lane.b32.xlu0 %v1491, %s1512
      %v1514 = vpop.permute.xlu0 %1513
      %s1516 = sor.u32 256, 48
      %1517 = vbcast.lane.b32.xlu0 %v1491, %s1516
      %v1518 = vpop.permute.xlu0 %1517
      %s1520 = sor.u32 256, 56
      %1521 = vbcast.lane.b32.xlu0 %v1491, %s1520
      %v1522 = vpop.permute.xlu0 %1521
      %s1524 = sor.u32 256, 64
      %1525 = vbcast.lane.b32.xlu0 %v1491, %s1524
      %v1526 = vpop.permute.xlu0 %1525
      %s1528 = sor.u32 256, 72
      %1529 = vbcast.lane.b32.xlu0 %v1491, %s1528
      %v1530 = vpop.permute.xlu0 %1529
      %s1532 = sor.u32 256, 80
      %1533 = vbcast.lane.b32.xlu0 %v1491, %s1532
      %v1534 = vpop.permute.xlu0 %1533
      %s1536 = sor.u32 256, 88
      %1537 = vbcast.lane.b32.xlu0 %v1491, %s1536
      %v1538 = vpop.permute.xlu0 %1537
      %s1540 = sor.u32 256, 96
      %1541 = vbcast.lane.b32.xlu0 %v1491, %s1540
      %v1542 = vpop.permute.xlu0 %1541
      %s1544 = sor.u32 256, 104
      %1545 = vbcast.lane.b32.xlu0 %v1491, %s1544
      %v1546 = vpop.permute.xlu0 %1545
      %s1548 = sor.u32 256, 112
      %1549 = vbcast.lane.b32.xlu0 %v1491, %s1548
      %v1550 = vpop.permute.xlu0 %1549
      %s1552 = sor.u32 256, 120
      %1553 = vbcast.lane.b32.xlu0 %v1491, %s1552
      %v1554 = vpop.permute.xlu0 %1553
      %v1555 = vlaneseq
      %v1556 = vshrl.u32 %v1555, 7
      %v1557 = vsub.s32 7, %v1556
      %v1558 = vrot.slane %v420, %v1557
      %1560 = vbcast.lane.b32.xlu0 %v1558, 256
      %v1561 = vpop.permute.xlu0 %1560
      %s1563 = sor.u32 256, 8
      %1564 = vbcast.lane.b32.xlu0 %v1558, %s1563
      %v1565 = vpop.permute.xlu0 %1564
      %s1567 = sor.u32 256, 16
      %1568 = vbcast.lane.b32.xlu0 %v1558, %s1567
      %v1569 = vpop.permute.xlu0 %1568
      %s1571 = sor.u32 256, 24
      %1572 = vbcast.lane.b32.xlu0 %v1558, %s1571
      %v1573 = vpop.permute.xlu0 %1572
      %s1575 = sor.u32 256, 32
      %1576 = vbcast.lane.b32.xlu0 %v1558, %s1575
      %v1577 = vpop.permute.xlu0 %1576
      %s1579 = sor.u32 256, 40
      %1580 = vbcast.lane.b32.xlu0 %v1558, %s1579
      %v1581 = vpop.permute.xlu0 %1580
      %s1583 = sor.u32 256, 48
      %1584 = vbcast.lane.b32.xlu0 %v1558, %s1583
      %v1585 = vpop.permute.xlu0 %1584
      %s1587 = sor.u32 256, 56
      %1588 = vbcast.lane.b32.xlu0 %v1558, %s1587
      %v1589 = vpop.permute.xlu0 %1588
      %s1591 = sor.u32 256, 64
      %1592 = vbcast.lane.b32.xlu0 %v1558, %s1591
      %v1593 = vpop.permute.xlu0 %1592
      %s1595 = sor.u32 256, 72
      %1596 = vbcast.lane.b32.xlu0 %v1558, %s1595
      %v1597 = vpop.permute.xlu0 %1596
      %s1599 = sor.u32 256, 80
      %1600 = vbcast.lane.b32.xlu0 %v1558, %s1599
      %v1601 = vpop.permute.xlu0 %1600
      %s1603 = sor.u32 256, 88
      %1604 = vbcast.lane.b32.xlu0 %v1558, %s1603
      %v1605 = vpop.permute.xlu0 %1604
      %s1607 = sor.u32 256, 96
      %1608 = vbcast.lane.b32.xlu0 %v1558, %s1607
      %v1609 = vpop.permute.xlu0 %1608
      %s1611 = sor.u32 256, 104
      %1612 = vbcast.lane.b32.xlu0 %v1558, %s1611
      %v1613 = vpop.permute.xlu0 %1612
      %s1615 = sor.u32 256, 112
      %1616 = vbcast.lane.b32.xlu0 %v1558, %s1615
      %v1617 = vpop.permute.xlu0 %1616
      %s1619 = sor.u32 256, 120
      %1620 = vbcast.lane.b32.xlu0 %v1558, %s1619
      %v1621 = vpop.permute.xlu0 %1620
      %v1622 = vsel %vm958, %v1092, 0.0
      %v1623 = vsel %vm959, %v1096, 0.0
      %v1624 = vsel %vm960, %v1100, 0.0
      %v1625 = vsel %vm961, %v1104, 0.0
      %v1626 = vsel %vm962, %v1108, 0.0
      %v1627 = vsel %vm963, %v1112, 0.0
      %v1628 = vsel %vm964, %v1116, 0.0
      %v1629 = vsel %vm965, %v1120, 0.0
      %v1630 = vsel %vm966, %v1124, 0.0
      %v1631 = vsel %vm967, %v1128, 0.0
      %v1632 = vsel %vm968, %v1132, 0.0
      %v1633 = vsel %vm969, %v1136, 0.0
      %v1634 = vsel %vm970, %v1140, 0.0
      %v1635 = vsel %vm971, %v1144, 0.0
      %v1636 = vsel %vm972, %v1148, 0.0
      %v1637 = vsel %vm973, %v1152, 0.0
      %v1638 = vsel %vm974, %v1159, 0.0
      %v1639 = vsel %vm975, %v1163, 0.0
      %v1640 = vsel %vm976, %v1167, 0.0
      %v1641 = vsel %vm977, %v1171, 0.0
      %v1642 = vsel %vm978, %v1175, 0.0
      %v1643 = vsel %vm979, %v1179, 0.0
      %v1644 = vsel %vm980, %v1183, 0.0
      %v1645 = vsel %vm981, %v1187, 0.0
      %v1646 = vsel %vm982, %v1191, 0.0
      %v1647 = vsel %vm983, %v1195, 0.0
      %v1648 = vsel %vm984, %v1199, 0.0
      %v1649 = vsel %vm985, %v1203, 0.0
      %v1650 = vsel %vm986, %v1207, 0.0
      %v1651 = vsel %vm987, %v1211, 0.0
      %v1652 = vsel %vm988, %v1215, 0.0
      %v1653 = vsel %vm989, %v1219, 0.0
      %v1654 = vsel %vm990, %v1226, 0.0
      %v1655 = vsel %vm991, %v1230, 0.0
      %v1656 = vsel %vm992, %v1234, 0.0
      %v1657 = vsel %vm993, %v1238, 0.0
      %v1658 = vsel %vm994, %v1242, 0.0
      %v1659 = vsel %vm995, %v1246, 0.0
      %v1660 = vsel %vm996, %v1250, 0.0
      %v1661 = vsel %vm997, %v1254, 0.0
      %v1662 = vsel %vm998, %v1258, 0.0
      %v1663 = vsel %vm999, %v1262, 0.0
      %v1664 = vsel %vm1000, %v1266, 0.0
      %v1665 = vsel %vm1001, %v1270, 0.0
      %v1666 = vsel %vm1002, %v1274, 0.0
      %v1667 = vsel %vm1003, %v1278, 0.0
      %v1668 = vsel %vm1004, %v1282, 0.0
      %v1669 = vsel %vm1005, %v1286, 0.0
      %v1670 = vsel %vm1006, %v1293, 0.0
      %v1671 = vsel %vm1007, %v1297, 0.0
      %v1672 = vsel %vm1008, %v1301, 0.0
      %v1673 = vsel %vm1009, %v1305, 0.0
      %v1674 = vsel %vm1010, %v1309, 0.0
      %v1675 = vsel %vm1011, %v1313, 0.0
      %v1676 = vsel %vm1012, %v1317, 0.0
      %v1677 = vsel %vm1013, %v1321, 0.0
      %v1678 = vsel %vm1014, %v1325, 0.0
      %v1679 = vsel %vm1015, %v1329, 0.0
      %v1680 = vsel %vm1016, %v1333, 0.0
      %v1681 = vsel %vm1017, %v1337, 0.0
      %v1682 = vsel %vm1018, %v1341, 0.0
      %v1683 = vsel %vm1019, %v1345, 0.0
      %v1684 = vsel %vm1020, %v1349, 0.0
      %v1685 = vsel %vm1021, %v1353, 0.0
      %v1686 = vsel %vm1022, %v1360, 0.0
      %v1687 = vsel %vm1023, %v1364, 0.0
      %v1688 = vsel %vm1024, %v1368, 0.0
      %v1689 = vsel %vm1025, %v1372, 0.0
      %v1690 = vsel %vm1026, %v1376, 0.0
      %v1691 = vsel %vm1027, %v1380, 0.0
      %v1692 = vsel %vm1028, %v1384, 0.0
      %v1693 = vsel %vm1029, %v1388, 0.0
      %v1694 = vsel %vm1030, %v1392, 0.0
      %v1695 = vsel %vm1031, %v1396, 0.0
      %v1696 = vsel %vm1032, %v1400, 0.0
      %v1697 = vsel %vm1033, %v1404, 0.0
      %v1698 = vsel %vm1034, %v1408, 0.0
      %v1699 = vsel %vm1035, %v1412, 0.0
      %v1700 = vsel %vm1036, %v1416, 0.0
      %v1701 = vsel %vm1037, %v1420, 0.0
      %v1702 = vsel %vm1038, %v1427, 0.0
      %v1703 = vsel %vm1039, %v1431, 0.0
      %v1704 = vsel %vm1040, %v1435, 0.0
      %v1705 = vsel %vm1041, %v1439, 0.0
      %v1706 = vsel %vm1042, %v1443, 0.0
      %v1707 = vsel %vm1043, %v1447, 0.0
      %v1708 = vsel %vm1044, %v1451, 0.0
      %v1709 = vsel %vm1045, %v1455, 0.0
      %v1710 = vsel %vm1046, %v1459, 0.0
      %v1711 = vsel %vm1047, %v1463, 0.0
      %v1712 = vsel %vm1048, %v1467, 0.0
      %v1713 = vsel %vm1049, %v1471, 0.0
      %v1714 = vsel %vm1050, %v1475, 0.0
      %v1715 = vsel %vm1051, %v1479, 0.0
      %v1716 = vsel %vm1052, %v1483, 0.0
      %v1717 = vsel %vm1053, %v1487, 0.0
      %v1718 = vsel %vm1054, %v1494, 0.0
      %v1719 = vsel %vm1055, %v1498, 0.0
      %v1720 = vsel %vm1056, %v1502, 0.0
      %v1721 = vsel %vm1057, %v1506, 0.0
      %v1722 = vsel %vm1058, %v1510, 0.0
      %v1723 = vsel %vm1059, %v1514, 0.0
      %v1724 = vsel %vm1060, %v1518, 0.0
      %v1725 = vsel %vm1061, %v1522, 0.0
      %v1726 = vsel %vm1062, %v1526, 0.0
      %v1727 = vsel %vm1063, %v1530, 0.0
      %v1728 = vsel %vm1064, %v1534, 0.0
      %v1729 = vsel %vm1065, %v1538, 0.0
      %v1730 = vsel %vm1066, %v1542, 0.0
      %v1731 = vsel %vm1067, %v1546, 0.0
      %v1732 = vsel %vm1068, %v1550, 0.0
      %v1733 = vsel %vm1069, %v1554, 0.0
      %v1734 = vsel %vm1070, %v1561, 0.0
      %v1735 = vsel %vm1071, %v1565, 0.0
      %v1736 = vsel %vm1072, %v1569, 0.0
      %v1737 = vsel %vm1073, %v1573, 0.0
      %v1738 = vsel %vm1074, %v1577, 0.0
      %v1739 = vsel %vm1075, %v1581, 0.0
      %v1740 = vsel %vm1076, %v1585, 0.0
      %v1741 = vsel %vm1077, %v1589, 0.0
      %v1742 = vsel %vm1078, %v1593, 0.0
      %v1743 = vsel %vm1079, %v1597, 0.0
      %v1744 = vsel %vm1080, %v1601, 0.0
      %v1745 = vsel %vm1081, %v1605, 0.0
      %v1746 = vsel %vm1082, %v1609, 0.0
      %v1747 = vsel %vm1083, %v1613, 0.0
      %v1748 = vsel %vm1084, %v1617, 0.0
      %v1749 = vsel %vm1085, %v1621, 0.0
      %v1750 = vadd.f32 %v1622, %v1623
      %v1751 = vadd.f32 %v1750, %v1624
      %v1752 = vadd.f32 %v1751, %v1625
      %v1753 = vadd.f32 %v1752, %v1626
      %v1754 = vadd.f32 %v1753, %v1627
      %v1755 = vadd.f32 %v1754, %v1628
      %v1756 = vadd.f32 %v1755, %v1629
      %v1757 = vadd.f32 %v1756, %v1630
      %v1758 = vadd.f32 %v1757, %v1631
      %v1759 = vadd.f32 %v1758, %v1632
      %v1760 = vadd.f32 %v1759, %v1633
      %v1761 = vadd.f32 %v1760, %v1634
      %v1762 = vadd.f32 %v1761, %v1635
      %v1763 = vadd.f32 %v1762, %v1636
      %v1764 = vadd.f32 %v1763, %v1637
      %v1765 = vrot.slane %v1764, 4
      %v1766 = vadd.f32 %v1764, %v1765
      %v1767 = vrot.slane %v1766, 2
      %v1768 = vadd.f32 %v1766, %v1767
      %v1769 = vrot.slane %v1768, 1
      %v1770 = vadd.f32 %v1768, %v1769
      %v1771 = vadd.f32 %v1638, %v1639
      %v1772 = vadd.f32 %v1771, %v1640
      %v1773 = vadd.f32 %v1772, %v1641
      %v1774 = vadd.f32 %v1773, %v1642
      %v1775 = vadd.f32 %v1774, %v1643
      %v1776 = vadd.f32 %v1775, %v1644
      %v1777 = vadd.f32 %v1776, %v1645
      %v1778 = vadd.f32 %v1777, %v1646
      %v1779 = vadd.f32 %v1778, %v1647
      %v1780 = vadd.f32 %v1779, %v1648
      %v1781 = vadd.f32 %v1780, %v1649
      %v1782 = vadd.f32 %v1781, %v1650
      %v1783 = vadd.f32 %v1782, %v1651
      %v1784 = vadd.f32 %v1783, %v1652
      %v1785 = vadd.f32 %v1784, %v1653
      %v1786 = vrot.slane %v1785, 4
      %v1787 = vadd.f32 %v1785, %v1786
      %v1788 = vrot.slane %v1787, 2
      %v1789 = vadd.f32 %v1787, %v1788
      %v1790 = vrot.slane %v1789, 1
      %v1791 = vadd.f32 %v1789, %v1790
      %v1792 = vadd.f32 %v1654, %v1655
      %v1793 = vadd.f32 %v1792, %v1656
      %v1794 = vadd.f32 %v1793, %v1657
      %v1795 = vadd.f32 %v1794, %v1658
      %v1796 = vadd.f32 %v1795, %v1659
      %v1797 = vadd.f32 %v1796, %v1660
      %v1798 = vadd.f32 %v1797, %v1661
      %v1799 = vadd.f32 %v1798, %v1662
      %v1800 = vadd.f32 %v1799, %v1663
      %v1801 = vadd.f32 %v1800, %v1664
      %v1802 = vadd.f32 %v1801, %v1665
      %v1803 = vadd.f32 %v1802, %v1666
      %v1804 = vadd.f32 %v1803, %v1667
      %v1805 = vadd.f32 %v1804, %v1668
      %v1806 = vadd.f32 %v1805, %v1669
      %v1807 = vrot.slane %v1806, 4
      %v1808 = vadd.f32 %v1806, %v1807
      %v1809 = vrot.slane %v1808, 2
      %v1810 = vadd.f32 %v1808, %v1809
      %v1811 = vrot.slane %v1810, 1
      %v1812 = vadd.f32 %v1810, %v1811
      %v1813 = vadd.f32 %v1670, %v1671
      %v1814 = vadd.f32 %v1813, %v1672
      %v1815 = vadd.f32 %v1814, %v1673
      %v1816 = vadd.f32 %v1815, %v1674
      %v1817 = vadd.f32 %v1816, %v1675
      %v1818 = vadd.f32 %v1817, %v1676
      %v1819 = vadd.f32 %v1818, %v1677
      %v1820 = vadd.f32 %v1819, %v1678
      %v1821 = vadd.f32 %v1820, %v1679
      %v1822 = vadd.f32 %v1821, %v1680
      %v1823 = vadd.f32 %v1822, %v1681
      %v1824 = vadd.f32 %v1823, %v1682
      %v1825 = vadd.f32 %v1824, %v1683
      %v1826 = vadd.f32 %v1825, %v1684
      %v1827 = vadd.f32 %v1826, %v1685
      %v1828 = vrot.slane %v1827, 4
      %v1829 = vadd.f32 %v1827, %v1828
      %v1830 = vrot.slane %v1829, 2
      %v1831 = vadd.f32 %v1829, %v1830
      %v1832 = vrot.slane %v1831, 1
      %v1833 = vadd.f32 %v1831, %v1832
      %v1834 = vadd.f32 %v1686, %v1687
      %v1835 = vadd.f32 %v1834, %v1688
      %v1836 = vadd.f32 %v1835, %v1689
      %v1837 = vadd.f32 %v1836, %v1690
      %v1838 = vadd.f32 %v1837, %v1691
      %v1839 = vadd.f32 %v1838, %v1692
      %v1840 = vadd.f32 %v1839, %v1693
      %v1841 = vadd.f32 %v1840, %v1694
      %v1842 = vadd.f32 %v1841, %v1695
      %v1843 = vadd.f32 %v1842, %v1696
      %v1844 = vadd.f32 %v1843, %v1697
      %v1845 = vadd.f32 %v1844, %v1698
      %v1846 = vadd.f32 %v1845, %v1699
      %v1847 = vadd.f32 %v1846, %v1700
      %v1848 = vadd.f32 %v1847, %v1701
      %v1849 = vrot.slane %v1848, 4
      %v1850 = vadd.f32 %v1848, %v1849
      %v1851 = vrot.slane %v1850, 2
      %v1852 = vadd.f32 %v1850, %v1851
      %v1853 = vrot.slane %v1852, 1
      %v1854 = vadd.f32 %v1852, %v1853
      %v1855 = vadd.f32 %v1702, %v1703
      %v1856 = vadd.f32 %v1855, %v1704
      %v1857 = vadd.f32 %v1856, %v1705
      %v1858 = vadd.f32 %v1857, %v1706
      %v1859 = vadd.f32 %v1858, %v1707
      %v1860 = vadd.f32 %v1859, %v1708
      %v1861 = vadd.f32 %v1860, %v1709
      %v1862 = vadd.f32 %v1861, %v1710
      %v1863 = vadd.f32 %v1862, %v1711
      %v1864 = vadd.f32 %v1863, %v1712
      %v1865 = vadd.f32 %v1864, %v1713
      %v1866 = vadd.f32 %v1865, %v1714
      %v1867 = vadd.f32 %v1866, %v1715
      %v1868 = vadd.f32 %v1867, %v1716
      %v1869 = vadd.f32 %v1868, %v1717
      %v1870 = vrot.slane %v1869, 4
      %v1871 = vadd.f32 %v1869, %v1870
      %v1872 = vrot.slane %v1871, 2
      %v1873 = vadd.f32 %v1871, %v1872
      %v1874 = vrot.slane %v1873, 1
      %v1875 = vadd.f32 %v1873, %v1874
      %v1876 = vadd.f32 %v1718, %v1719
      %v1877 = vadd.f32 %v1876, %v1720
      %v1878 = vadd.f32 %v1877, %v1721
      %v1879 = vadd.f32 %v1878, %v1722
      %v1880 = vadd.f32 %v1879, %v1723
      %v1881 = vadd.f32 %v1880, %v1724
      %v1882 = vadd.f32 %v1881, %v1725
      %v1883 = vadd.f32 %v1882, %v1726
      %v1884 = vadd.f32 %v1883, %v1727
      %v1885 = vadd.f32 %v1884, %v1728
      %v1886 = vadd.f32 %v1885, %v1729
      %v1887 = vadd.f32 %v1886, %v1730
      %v1888 = vadd.f32 %v1887, %v1731
      %v1889 = vadd.f32 %v1888, %v1732
      %v1890 = vadd.f32 %v1889, %v1733
      %v1891 = vrot.slane %v1890, 4
      %v1892 = vadd.f32 %v1890, %v1891
      %v1893 = vrot.slane %v1892, 2
      %v1894 = vadd.f32 %v1892, %v1893
      %v1895 = vrot.slane %v1894, 1
      %v1896 = vadd.f32 %v1894, %v1895
      %v1897 = vadd.f32 %v1734, %v1735
      %v1898 = vadd.f32 %v1897, %v1736
      %v1899 = vadd.f32 %v1898, %v1737
      %v1900 = vadd.f32 %v1899, %v1738
      %v1901 = vadd.f32 %v1900, %v1739
      %v1902 = vadd.f32 %v1901, %v1740
      %v1903 = vadd.f32 %v1902, %v1741
      %v1904 = vadd.f32 %v1903, %v1742
      %v1905 = vadd.f32 %v1904, %v1743
      %v1906 = vadd.f32 %v1905, %v1744
      %v1907 = vadd.f32 %v1906, %v1745
      %v1908 = vadd.f32 %v1907, %v1746
      %v1909 = vadd.f32 %v1908, %v1747
      %v1910 = vadd.f32 %v1909, %v1748
      %v1911 = vadd.f32 %v1910, %v1749
      %v1912 = vrot.slane %v1911, 4
      %v1913 = vadd.f32 %v1911, %v1912
      %v1914 = vrot.slane %v1913, 2
      %v1915 = vadd.f32 %v1913, %v1914
      %v1916 = vrot.slane %v1915, 1
      %v1917 = vadd.f32 %v1915, %v1916
      %v1918 = vpack.c.bf16 %v1770, %v1770
      %v1919 = vpack.c.bf16 %v1791, %v1791
      %v1920 = vpack.c.bf16 %v1812, %v1812
      %v1921 = vpack.c.bf16 %v1833, %v1833
      %v1922 = vpack.c.bf16 %v1854, %v1854
      %v1923 = vpack.c.bf16 %v1875, %v1875
      %v1924 = vpack.c.bf16 %v1896, %v1896
      %v1925 = vpack.c.bf16 %v1917, %v1917
      %v1926 = vld [vmem:[%s3] sm:$0xf]
      %v1927 = vld [vmem:[%s3 + $0x4] sm:$0xf]
      %v1928 = vld [vmem:[%s3 + $0x8] sm:$0xf]
      %v1929 = vld [vmem:[%s3 + $0xc] sm:$0xf]
      %v1930 = vld [vmem:[%s3 + $0x10] sm:$0xf]
      %v1931 = vld [vmem:[%s3 + $0x14] sm:$0xf]
      %v1932 = vld [vmem:[%s3 + $0x18] sm:$0xf]
      %v1933 = vld [vmem:[%s3 + $0x1c] sm:$0xf]
      %v1934 = vld [vmem:[%s3 + $0x20] sm:$0xf]
      %v1935 = vld [vmem:[%s3 + $0x24] sm:$0xf]
      %v1936 = vld [vmem:[%s3 + $0x28] sm:$0xf]
      %v1937 = vld [vmem:[%s3 + $0x2c] sm:$0xf]
      %v1938 = vld [vmem:[%s3 + $0x30] sm:$0xf]
      %v1939 = vld [vmem:[%s3 + $0x34] sm:$0xf]
      %v1940 = vld [vmem:[%s3 + $0x38] sm:$0xf]
      %v1941 = vld [vmem:[%s3 + $0x3c] sm:$0xf]
      %v1942 = vld [vmem:[%s393] sm:$0xff]
      %vm1943 = vcmp.eq.s32.totalorder %v1942, 0
      %v1944 = vsel %vm1943, 1, 0
      %v1945 = vcvt.s32.f32 %v1944
      %v1946 = vmul.f32 %v420, %v1945
      %1947 = vadd.xlane.f32.xlu0 %v1946
      %v1948 = vpop.xlane.xlu0 %1947
      %v1949 = vld [vmem:[%s4] sm:$0x1]
      %v1950 = vunpack.c.l.bf16 %v1949
      %v1951 = vlaneseq
      %v1952 = vshrl.u32 %v1951, 7
      %v1953 = vsub.s32 0, %v1952
      %v1954 = vrot.slane %v1950, %v1953
      %v1955 = vmul.f32 %v1948, %v1954
      %v1964 = vunpack.c.l.b16 %v1918
      %v1965 = vunpack.c.l.b16 %v1919
      %v1966 = vunpack.c.l.b16 %v1920
      %v1967 = vunpack.c.l.b16 %v1921
      %v1968 = vunpack.c.l.b16 %v1922
      %v1969 = vunpack.c.l.b16 %v1923
      %v1970 = vunpack.c.l.b16 %v1924
      %v1971 = vunpack.c.l.b16 %v1925
      %vm1972 = vcmask 1041409
      %v1973 = vsel %vm1972, %v1965, %v1964
      %vm1974 = vcmask 1042434
      %v1975 = vsel %vm1974, %v1966, %v1973
      %vm1976 = vcmask 1043459
      %v1977 = vsel %vm1976, %v1967, %v1975
      %vm1978 = vcmask 1044484
      %v1979 = vsel %vm1978, %v1968, %v1977
      %vm1980 = vcmask 1045509
      %v1981 = vsel %vm1980, %v1969, %v1979
      %vm1982 = vcmask 1046534
      %v1983 = vsel %vm1982, %v1970, %v1981
      %vm1984 = vcmask 1047559
      %v1985 = vsel %vm1984, %v1971, %v1983
      %v1986 = vpack.c.b16 %v1985, %v1985
      %v2004 = vunpack.c.l.b16 %v1926
      %v2005 = vunpack.c.l.b16 %v1927
      %v2006 = vunpack.c.l.b16 %v1928
      %v2007 = vunpack.c.l.b16 %v1929
      %v2008 = vunpack.c.l.b16 %v1930
      %v2009 = vunpack.c.l.b16 %v1931
      %v2010 = vunpack.c.l.b16 %v1932
      %v2011 = vunpack.c.l.b16 %v1933
      %v2012 = vunpack.c.l.b16 %v1934
      %v2013 = vunpack.c.l.b16 %v1935
      %v2014 = vunpack.c.l.b16 %v1936
      %v2015 = vunpack.c.l.b16 %v1937
      %v2016 = vunpack.c.l.b16 %v1938
      %v2017 = vunpack.c.l.b16 %v1939
      %v2018 = vunpack.c.l.b16 %v1940
      %v2019 = vunpack.c.l.b16 %v1941
      %v2020 = vpack.c.b16 %v2005, %v2004
      %v2021 = vpack.c.b16 %v2007, %v2006
      %v2022 = vpack.c.b16 %v2009, %v2008
      %v2023 = vpack.c.b16 %v2011, %v2010
      %v2024 = vpack.c.b16 %v2013, %v2012
      %v2025 = vpack.c.b16 %v2015, %v2014
      %v2026 = vpack.c.b16 %v2017, %v2016
      %v2027 = vpack.c.b16 %v2019, %v2018
      %2036 = vmatprep.subr.bf16.mxu0 0
      %2037 = vmatpush1.bf16.msra.mxu0 %v2020
      %2038 = vmatprep.subr.bf16.mxu0 0
      %2039 = vmatpush1.bf16.msra.mxu0 %v2021
      %2040 = vmatprep.subr.bf16.mxu0 0
      %2041 = vmatpush1.bf16.msra.mxu0 %v2022
      %2042 = vmatprep.subr.bf16.mxu0 0
      %2043 = vmatpush1.bf16.msra.mxu0 %v2023
      %2044 = vmatprep.subr.bf16.mxu0 0
      %2045 = vmatpush1.bf16.msra.mxu0 %v2024
      %2046 = vmatprep.subr.bf16.mxu0 0
      %2047 = vmatpush1.bf16.msra.mxu0 %v2025
      %2048 = vmatprep.subr.bf16.mxu0 0
      %2049 = vmatpush1.bf16.msra.mxu0 %v2026
      %2050 = vmatprep.subr.bf16.mxu0 0
      %2051 = vmatpush1.bf16.msra.mxu0 %v2027
      %2052 = vmatprep.subr.bf16.mxu0 0
      %2053 = vmatpush1.bf16.msra.mxu0 0
      %2054 = vmatprep.subr.bf16.mxu0 0
      %2055 = vmatpush1.bf16.msra.mxu0 0
      %2056 = vmatprep.subr.bf16.mxu0 0
      %2057 = vmatpush1.bf16.msra.mxu0 0
      %2058 = vmatprep.subr.bf16.mxu0 0
      %2059 = vmatpush1.bf16.msra.mxu0 0
      %2060 = vmatprep.subr.bf16.mxu0 0
      %2061 = vmatpush1.bf16.msra.mxu0 0
      %2062 = vmatprep.subr.bf16.mxu0 0
      %2063 = vmatpush1.bf16.msra.mxu0 0
      %2064 = vmatprep.subr.bf16.mxu0 0
      %2065 = vmatpush1.bf16.msra.mxu0 0
      %2066 = vmatprep.subr.bf16.mxu0 0
      %2067 = vmatpush1.bf16.msra.mxu0 0
      %2068 = vmatprep.mubr.bf16.mxu0 0
      %2069 = vmatmul.mubr.bf16.gmra.mrb[0].mxu0 %v1986
      %v2070 = vpop.f32.mrb[0].mxu0
      %v2071 = vadd.f32 %v1955, %v2070
      %v2072 = vpop.f32.mrb[0].mxu0
      %v2073 = vpop.f32.mrb[0].mxu0
      %v2074 = vpop.f32.mrb[0].mxu0
      %2075 = vdwg.mxu0
      %vm2076 = vcmp.eq.s32.totalorder %v1942, 1
      %v2077 = vsel %vm2076, 1, 0
      %v2078 = vcvt.s32.f32 %v2077
      %v2079 = vmul.f32 %v420, %v2078
      %2080 = vadd.xlane.f32.xlu0 %v2079
      %v2081 = vpop.xlane.xlu0 %2080
      %v2082 = vlaneseq
      %v2083 = vshrl.u32 %v2082, 7
      %v2084 = vsub.s32 1, %v2083
      %v2085 = vrot.slane %v1950, %v2084
      %v2086 = vmul.f32 %v2081, %v2085
      %v2087 = vadd.f32 %v2071, %v2086
      %v2088 = vld [vmem:[#allocation2] sm:$0xff]
      %v2089 = vadd.f32 %v2088, %v2087
      %vm2090 = vcmask 523264
      %2091 = vst.msk [vmem:[#allocation2] sm:$0xff] %vm2090, %v2089
      %p2092 = scmp.eq.s32.totalorder %s25, 1
      // Predicated region
      $region61: #{bert_classifier_forward.1} parent=55 // pred_check
        %p2093 = pneg %p2092
      $region62: #{bert_classifier_forward.1} parent=55 // pred_check_branch
        %2095 = sbr.rel (%p2093) target = $region64
      $region63: #{bert_classifier_forward.1} parent=55 // pred_region
        %v2096 = vcvt.s32.f32 %v409
        %v2097 = vmax.f32 %v2096, 1.0
        %v2098 = vld [vmem:[#allocation2] sm:$0xff]
        %2100 = vset.pattern.permute.xlu0 0
        %2101 = vperm.xlu0 %2100, %v2097
        %v2102 = vpop.permute.xlu0 %2101
        %v2104 = vrcp.pop %v2102
        %v2105 = vmul.f32 %v2098, %v2104
        %v2106 = vld [vmem:[%s5] sm:$0xf]
        %v2107 = vld [vmem:[%s5 + $0x4] sm:$0xf]
        %v2108 = vld [vmem:[%s5 + $0x8] sm:$0xf]
        %v2109 = vld [vmem:[%s5 + $0xc] sm:$0xf]
        %v2110 = vld [vmem:[%s5 + $0x10] sm:$0xf]
        %v2111 = vld [vmem:[%s5 + $0x14] sm:$0xf]
        %v2112 = vld [vmem:[%s5 + $0x18] sm:$0xf]
        %v2113 = vld [vmem:[%s5 + $0x1c] sm:$0xf]
        %v2114 = vunpack.c.l.bf16 %v2106
        %v2115 = vunpack.c.l.bf16 %v2107
        %v2116 = vunpack.c.l.bf16 %v2108
        %v2117 = vunpack.c.l.bf16 %v2109
        %v2118 = vunpack.c.l.bf16 %v2110
        %v2119 = vunpack.c.l.bf16 %v2111
        %v2120 = vunpack.c.l.bf16 %v2112
        %v2121 = vunpack.c.l.bf16 %v2113
        %v2122 = vld [vmem:[%s6] sm:$0x1]
        %v2124 = vlaneseq
        %v2125 = vshrl.u32 %v2124, 7
        %v2126 = vsub.s32 0, %v2125
        %v2127 = vrot.slane %v2122, %v2126
        %v2130 = vsel %vm2090, %v2105, 0
        %2132 = vmatprep.subr.mxu0 0.0
        %2133 = vmatpush1.msra.mxu0 %v2114
        %2134 = vmatprep.subr.mxu0 0.0
        %2135 = vmatpush1.msra.mxu0 %v2115
        %2136 = vmatprep.subr.mxu0 0.0
        %2137 = vmatpush1.msra.mxu0 %v2116
        %2138 = vmatprep.subr.mxu0 0.0
        %2139 = vmatpush1.msra.mxu0 %v2117
        %2140 = vmatprep.subr.mxu0 0.0
        %2141 = vmatpush1.msra.mxu0 %v2118
        %2142 = vmatprep.subr.mxu0 0.0
        %2143 = vmatpush1.msra.mxu0 %v2119
        %2144 = vmatprep.subr.mxu0 0.0
        %2145 = vmatpush1.msra.mxu0 %v2120
        %2146 = vmatprep.subr.mxu0 0.0
        %2147 = vmatpush1.msra.mxu0 %v2121
        %2148 = vmatprep.subr.mxu0 0.0
        %2149 = vmatpush1.msra.mxu0 0.0
        %2150 = vmatprep.subr.mxu0 0.0
        %2151 = vmatpush1.msra.mxu0 0.0
        %2152 = vmatprep.subr.mxu0 0.0
        %2153 = vmatpush1.msra.mxu0 0.0
        %2154 = vmatprep.subr.mxu0 0.0
        %2155 = vmatpush1.msra.mxu0 0.0
        %2156 = vmatprep.subr.mxu0 0.0
        %2157 = vmatpush1.msra.mxu0 0.0
        %2158 = vmatprep.subr.mxu0 0.0
        %2159 = vmatpush1.msra.mxu0 0.0
        %2160 = vmatprep.subr.mxu0 0.0
        %2161 = vmatpush1.msra.mxu0 0.0
        %2162 = vmatprep.subr.mxu0 0.0
        %2163 = vmatpush1.msra.mxu0 0.0
        %2164 = vmatprep.subr.mxu0 0.0
        %2165 = vmatpush1.msra.mxu0 0.0
        %2166 = vmatprep.subr.mxu0 0.0
        %2167 = vmatpush1.msra.mxu0 0.0
        %2168 = vmatprep.subr.mxu0 0.0
        %2169 = vmatpush1.msra.mxu0 0.0
        %2170 = vmatprep.subr.mxu0 0.0
        %2171 = vmatpush1.msra.mxu0 0.0
        %2172 = vmatprep.subr.mxu0 0.0
        %2173 = vmatpush1.msra.mxu0 0.0
        %2174 = vmatprep.subr.mxu0 0.0
        %2175 = vmatpush1.msra.mxu0 0.0
        %2176 = vmatprep.subr.mxu0 0.0
        %2177 = vmatpush1.msra.mxu0 0.0
        %2178 = vmatprep.subr.mxu0 0.0
        %2179 = vmatpush1.msra.mxu0 0.0
        %2180 = vmatprep.subr.mxu0 0.0
        %2181 = vmatpush1.msra.mxu0 0.0
        %2182 = vmatprep.subr.mxu0 0.0
        %2183 = vmatpush1.msra.mxu0 0.0
        %2184 = vmatprep.subr.mxu0 0.0
        %2185 = vmatpush1.msra.mxu0 0.0
        %2186 = vmatprep.subr.mxu0 0.0
        %2187 = vmatpush1.msra.mxu0 0.0
        %2188 = vmatprep.subr.mxu0 0.0
        %2189 = vmatpush1.msra.mxu0 0.0
        %2190 = vmatprep.subr.mxu0 0.0
        %2191 = vmatpush1.msra.mxu0 0.0
        %2192 = vmatprep.subr.mxu0 0.0
        %2193 = vmatpush1.msra.mxu0 0.0
        %2194 = vmatprep.subr.mxu0 0.0
        %2195 = vmatpush1.msra.mxu0 0.0
        %2196 = vmatprep.mubr.f32.mxu0 0.0
        %2197 = vmatmul.mubr.f32.gmra.mrb[0].mxu0 %v2130
        %v2198 = vpop.f32.mrb[0].mxu0
        %v2199 = vadd.f32 %v2127, %v2198
        %v2200 = vpop.f32.mrb[0].mxu0
        %2201 = vdwg.mxu0
        %v2202 = vtanh.pop %v2199
        %v2203 = vld [vmem:[%s7] sm:$0xff]
        %v2204 = vld [vmem:[%s7 + $0x8] sm:$0xff]
        %v2205 = vld [vmem:[%s7 + $0x10] sm:$0xff]
        %v2206 = vld [vmem:[%s7 + $0x18] sm:$0xff]
        %v2207 = vld [vmem:[%s7 + $0x20] sm:$0xff]
        %v2208 = vld [vmem:[%s7 + $0x28] sm:$0xff]
        %v2209 = vld [vmem:[%s7 + $0x30] sm:$0xff]
        %v2210 = vld [vmem:[%s7 + $0x38] sm:$0xff]
        %v2211 = vld [vmem:[%s8] sm:$0x1]
        %v2213 = vlaneseq
        %v2214 = vshrl.u32 %v2213, 7
        %v2215 = vsub.s32 0, %v2214
        %v2216 = vrot.slane %v2211, %v2215
        %v2219 = vsel %vm2090, %v2202, 0
        %2221 = vmatprep.subr.mxu0 0.0
        %2222 = vmatpush1.msra.mxu0 %v2203
        %2223 = vmatprep.subr.mxu0 0.0
        %2224 = vmatpush1.msra.mxu0 %v2204
        %2225 = vmatprep.subr.mxu0 0.0
        %2226 = vmatpush1.msra.mxu0 %v2205
        %2227 = vmatprep.subr.mxu0 0.0
        %2228 = vmatpush1.msra.mxu0 %v2206
        %2229 = vmatprep.subr.mxu0 0.0
        %2230 = vmatpush1.msra.mxu0 %v2207
        %2231 = vmatprep.subr.mxu0 0.0
        %2232 = vmatpush1.msra.mxu0 %v2208
        %2233 = vmatprep.subr.mxu0 0.0
        %2234 = vmatpush1.msra.mxu0 %v2209
        %2235 = vmatprep.subr.mxu0 0.0
        %2236 = vmatpush1.msra.mxu0 %v2210
        %2237 = vmatprep.subr.mxu0 0.0
        %2238 = vmatpush1.msra.mxu0 0.0
        %2239 = vmatprep.subr.mxu0 0.0
        %2240 = vmatpush1.msra.mxu0 0.0
        %2241 = vmatprep.subr.mxu0 0.0
        %2242 = vmatpush1.msra.mxu0 0.0
        %2243 = vmatprep.subr.mxu0 0.0
        %2244 = vmatpush1.msra.mxu0 0.0
        %2245 = vmatprep.subr.mxu0 0.0
        %2246 = vmatpush1.msra.mxu0 0.0
        %2247 = vmatprep.subr.mxu0 0.0
        %2248 = vmatpush1.msra.mxu0 0.0
        %2249 = vmatprep.subr.mxu0 0.0
        %2250 = vmatpush1.msra.mxu0 0.0
        %2251 = vmatprep.subr.mxu0 0.0
        %2252 = vmatpush1.msra.mxu0 0.0
        %2253 = vmatprep.subr.mxu0 0.0
        %2254 = vmatpush1.msra.mxu0 0.0
        %2255 = vmatprep.subr.mxu0 0.0
        %2256 = vmatpush1.msra.mxu0 0.0
        %2257 = vmatprep.subr.mxu0 0.0
        %2258 = vmatpush1.msra.mxu0 0.0
        %2259 = vmatprep.subr.mxu0 0.0
        %2260 = vmatpush1.msra.mxu0 0.0
        %2261 = vmatprep.subr.mxu0 0.0
        %2262 = vmatpush1.msra.mxu0 0.0
        %2263 = vmatprep.subr.mxu0 0.0
        %2264 = vmatpush1.msra.mxu0 0.0
        %2265 = vmatprep.subr.mxu0 0.0
        %2266 = vmatpush1.msra.mxu0 0.0
        %2267 = vmatprep.subr.mxu0 0.0
        %2268 = vmatpush1.msra.mxu0 0.0
        %2269 = vmatprep.subr.mxu0 0.0
        %2270 = vmatpush1.msra.mxu0 0.0
        %2271 = vmatprep.subr.mxu0 0.0
        %2272 = vmatpush1.msra.mxu0 0.0
        %2273 = vmatprep.subr.mxu0 0.0
        %2274 = vmatpush1.msra.mxu0 0.0
        %2275 = vmatprep.subr.mxu0 0.0
        %2276 = vmatpush1.msra.mxu0 0.0
        %2277 = vmatprep.subr.mxu0 0.0
        %2278 = vmatpush1.msra.mxu0 0.0
        %2279 = vmatprep.subr.mxu0 0.0
        %2280 = vmatpush1.msra.mxu0 0.0
        %2281 = vmatprep.subr.mxu0 0.0
        %2282 = vmatpush1.msra.mxu0 0.0
        %2283 = vmatprep.subr.mxu0 0.0
        %2284 = vmatpush1.msra.mxu0 0.0
        %2285 = vmatprep.mubr.f32.mxu0 0.0
        %2286 = vmatmul.mubr.f32.gmra.mrb[0].mxu0 %v2219
        %v2287 = vpop.f32.mrb[0].mxu0
        %v2288 = vadd.f32 %v2216, %v2287
        %v2289 = vpop.f32.mrb[0].mxu0
        %2290 = vdwg.mxu0
        %2291 = vst [vmem:[%s401] sm:$0xff] %v2288
      $region64: #{bert_classifier_forward.1} parent=55 // pred_fallthru
        _
      %p2292 = scmp.lt.s32.totalorder %s24, 1
      %s2293 = scalar_select %p2292, %s24, 1
      %s2294 = smul.addr %s2293, 8
      %s2295 = scalar_lea.vmem %s9, %s2294
      // Predicated region
      $region65: #{bert_classifier_forward.1} parent=55 // pred_check
        %p2296 = pneg %p258
      $region66: #{bert_classifier_forward.1} parent=55 // pred_check_branch
        %2298 = sbr.rel (%p2296) target = $region68
      $region67: #{bert_classifier_forward.1} parent=55 // pred_region
        _
      $region68: #{bert_classifier_forward.1} parent=55 // pred_fallthru
        _
    $region56: #{bert_classifier_forward.1} parent=5 // pred_fallthru
      _
    %p2299 = scmp.le.s32.totalorder 2, %s15
    // Predicated region
    $region69: #{bert_classifier_forward.1} parent=5 // pred_check
      %p2300 = pneg %p2299
    $region70: #{bert_classifier_forward.1} parent=5 // pred_check_branch
      %2302 = sbr.rel (%p2300) target = $region72
    $region71: #{bert_classifier_forward.1} parent=5 // pred_region
      %s2303 = ssub.s32 %s15, 2
      // Predicated region
      $region73: #{bert_classifier_forward.1} parent=71 // pred_check
        %p2304 = pneg %p264
      $region74: #{bert_classifier_forward.1} parent=71 // pred_check_branch
        %2306 = sbr.rel (%p2304) target = $region76
      $region75: #{bert_classifier_forward.1} parent=71 // pred_region
        %p2307 = scmp.lt.s32.totalorder %s26, 1
        %s2308 = scalar_select %p2307, %s26, 1
        %s2309 = smul.addr %s2308, 8
        %s2310 = scalar_lea.vmem %s9, %s2309
      $region76: #{bert_classifier_forward.1} parent=71 // pred_fallthru
        _
    $region72: #{bert_classifier_forward.1} parent=5 // pred_fallthru
      _
  $region6: #{bert_classifier_forward.1} parent=0 // loop_footer
    %s19 = sadd.s32 1, %s15
  $region7: #{bert_classifier_forward.1} parent=0 // loop_footer_branch
    %14 = sbr.rel target = $region3
  $region8: #{bert_classifier_forward.1} parent=0 // loop_exit
    _

</llo_original>
